<compile_context>
chip_gen: v7x
topology: tpu7x:2x2x1
jax: 0.10.0
libtpu: 0.0.40
codegen_flags: <defaults>
</compile_context>

<pallas_src>
import math

import jax
import jax.numpy as jnp
from jax.experimental import pallas as pl
from jax.experimental.pallas import tpu as pltpu

N_CHANNELS = 9
TIME_RANGE = 13
HIDDEN = (128, 256, 128)
IN_DIM = N_CHANNELS * TIME_RANGE    # 117
OUT_DIM = TIME_RANGE * N_CHANNELS   # 117
IN_PAD = 128                        # lane-dense padded feature width
OUT_PAD = 128


def controlnet_kernel(x_ref,
                      w1_ref, b1_ref,
                      w2_ref, b2_ref,
                      w3_ref, b3_ref,
                      w4_ref, b4_ref,
                      o_ref):
    # Entire MLP hot path lives in the kernel: 4 MXU matmuls (bf16 operands,
    # f32 accumulation) + VPU bias adds / ReLUs in f32.
    x = x_ref[...].astype(jnp.bfloat16)
    h = jnp.dot(x, w1_ref[...], preferred_element_type=jnp.float32) + b1_ref[...]
    h = jnp.maximum(h, 0.0)
    h = jnp.dot(h.astype(jnp.bfloat16), w2_ref[...],
                preferred_element_type=jnp.float32) + b2_ref[...]
    h = jnp.maximum(h, 0.0)
    h = jnp.dot(h.astype(jnp.bfloat16), w3_ref[...],
                preferred_element_type=jnp.float32) + b3_ref[...]
    h = jnp.maximum(h, 0.0)
    y = jnp.dot(h.astype(jnp.bfloat16), w4_ref[...],
                preferred_element_type=jnp.float32) + b4_ref[...]
    o_ref[...] = y.astype(o_ref.dtype)


def prepare_params(params):
    """Zero-pad the ragged 117 dims to 128 and cast weights to bf16 (biases stay f32)."""
    w1, b1, w2, b2, w3, b3, w4, b4 = params
    w1_p = jnp.zeros((IN_PAD, HIDDEN[0]), jnp.float32).at[:IN_DIM, :].set(w1)
    w4_p = jnp.zeros((HIDDEN[2], OUT_PAD), jnp.float32).at[:, :OUT_DIM].set(w4)
    b4_p = jnp.zeros((1, OUT_PAD), jnp.float32).at[:, :OUT_DIM].set(b4)
    return (w1_p.astype(jnp.bfloat16), b1,
            w2.astype(jnp.bfloat16), b2,
            w3.astype(jnp.bfloat16), b3,
            w4_p.astype(jnp.bfloat16), b4_p)


def controlnet_forward(x, prepared_params, *, tb=256):
    """x: (B, 117) float32. Returns (B, 117) float32."""
    B = x.shape[0]
    w1, b1, w2, b2, w3, b3, w4, b4 = prepared_params

    # Pad batch to a multiple of tb and features to 128 (lane-dense tiles).
    Bp = ((B + tb - 1) // tb) * tb
    x_p = jnp.zeros((Bp, IN_PAD), x.dtype).at[:B, :IN_DIM].set(x)

    def rep_spec(shape):
        # Weights/biases: whole array resident, same block every grid step
        # (constant index_map -> no re-DMA across steps).
        return pl.BlockSpec(shape, lambda i: (0, 0))

    n_steps = Bp // tb
    flops = 2 * Bp * (IN_PAD * HIDDEN[0] + HIDDEN[0] * HIDDEN[1]
                      + HIDDEN[1] * HIDDEN[2] + HIDDEN[2] * OUT_PAD)
    weight_bytes = sum(int(a.size) * a.dtype.itemsize
                       for a in (w1, b1, w2, b2, w3, b3, w4, b4))
    bytes_accessed = Bp * IN_PAD * 4 + Bp * OUT_PAD * 4 + weight_bytes

    y_p = pl.pallas_call(
        controlnet_kernel,
        out_shape=jax.ShapeDtypeStruct((Bp, OUT_PAD), x.dtype),
        grid_spec=pltpu.PrefetchScalarGridSpec(
            num_scalar_prefetch=0,
            grid=(n_steps,),
            in_specs=[
                pl.BlockSpec((tb, IN_PAD), lambda i: (i, 0)),
                rep_spec(w1.shape), rep_spec(b1.shape),
                rep_spec(w2.shape), rep_spec(b2.shape),
                rep_spec(w3.shape), rep_spec(b3.shape),
                rep_spec(w4.shape), rep_spec(b4.shape),
            ],
            out_specs=pl.BlockSpec((tb, OUT_PAD), lambda i: (i, 0)),
        ),
        compiler_params=pltpu.CompilerParams(
            dimension_semantics=("parallel",)),
        cost_estimate=pl.CostEstimate(flops=flops, transcendentals=0,
                                      bytes_accessed=bytes_accessed),
    )(x_p, w1, b1, w2, b2, w3, b3, w4, b4)

    # Slice away batch padding and the zero-valued padded output lanes.
    return y_p[:B, :OUT_DIM]


def init_params(key):
    """Deterministic PyTorch-style (Kaiming-uniform) init for the four Linear layers."""
    dims = [(IN_DIM, HIDDEN[0]), (HIDDEN[0], HIDDEN[1]),
            (HIDDEN[1], HIDDEN[2]), (HIDDEN[2], OUT_DIM)]
    params = []
    for (fan_in, fan_out) in dims:
        key, kw, kb = jax.random.split(key, 3)
        bound = 1.0 / math.sqrt(fan_in)
        w = jax.random.uniform(kw, (fan_in, fan_out), jnp.float32, -bound, bound)
        b = jax.random.uniform(kb, (1, fan_out), jnp.float32, -bound, bound)
        params += [w, b]
    return tuple(params)


def reference_forward_bf16(x, prepared_params):
    """Pure-JAX reference using the same bf16-operand / f32-accumulate recipe."""
    w1, b1, w2, b2, w3, b3, w4, b4 = prepared_params
    x_p = jnp.zeros((x.shape[0], IN_PAD), x.dtype).at[:, :IN_DIM].set(x)
    h = x_p.astype(jnp.bfloat16)
    h = jnp.maximum(jnp.dot(h, w1, preferred_element_type=jnp.float32) + b1, 0.0)
    h = jnp.maximum(jnp.dot(h.astype(jnp.bfloat16), w2,
                            preferred_element_type=jnp.float32) + b2, 0.0)
    h = jnp.maximum(jnp.dot(h.astype(jnp.bfloat16), w3,
                            preferred_element_type=jnp.float32) + b3, 0.0)
    y = jnp.dot(h.astype(jnp.bfloat16), w4,
                preferred_element_type=jnp.float32) + b4
    return y[:, :OUT_DIM]


def reference_forward_f32(x, params):
    w1, b1, w2, b2, w3, b3, w4, b4 = params
    h = jnp.maximum(x @ w1 + b1, 0.0)
    h = jnp.maximum(h @ w2 + b2, 0.0)
    h = jnp.maximum(h @ w3 + b3, 0.0)
    return h @ w4 + b4


if __name__ == "__main__":
    key = jax.random.PRNGKey(0)
    kx, kp = jax.random.split(key)
    B = 512          # 2 grid steps at tb=256 -> both v7x TensorCores get work
    x = jax.random.normal(kx, (B, IN_DIM), dtype=jnp.float32)
    params = init_params(kp)
    prepared = prepare_params(params)

    y = controlnet_forward(x, prepared, tb=256)
    y = jax.block_until_ready(y)
    assert y.shape == (B, OUT_DIM)

    # Tight check against a reference that uses the same bf16-operand recipe.
    y_ref = reference_forward_bf16(x, prepared)
    assert jnp.allclose(y, y_ref, atol=1e-2, rtol=1e-2), "mismatch vs bf16 reference"

    # Loose sanity check against the pure-f32 reference (bf16 rounding only).
    y_f32 = reference_forward_f32(x, params)
    assert jnp.allclose(y, y_f32, atol=5e-2, rtol=5e-2), "mismatch vs f32 reference"

    print("KERNEL_OK")
</pallas_src>

<mosaic_0001>
module attributes {stable_mosaic.version = 11 : i64} {
  func.func @controlnet_kernel(%arg0: i32, %arg1: memref<256x128xf32, #tpu.memory_space<vmem>>, %arg2: memref<128x128xbf16, #tpu.memory_space<vmem>>, %arg3: memref<1x128xf32, #tpu.memory_space<vmem>>, %arg4: memref<128x256xbf16, #tpu.memory_space<vmem>>, %arg5: memref<1x256xf32, #tpu.memory_space<vmem>>, %arg6: memref<256x128xbf16, #tpu.memory_space<vmem>>, %arg7: memref<1x128xf32, #tpu.memory_space<vmem>>, %arg8: memref<128x128xbf16, #tpu.memory_space<vmem>>, %arg9: memref<1x128xf32, #tpu.memory_space<vmem>>, %arg10: memref<256x128xf32, #tpu.memory_space<vmem>>) attributes {dimension_semantics = [#tpu.dimension_semantics<parallel>], iteration_bounds = array<i64: 2>, scalar_prefetch = 0 : i64, scratch_operands = 0 : i64, tpu.core_type = #tpu.core_type<tc>, window_params = [{transform_indices = @transform_0, window_bounds = array<i64: 256, 128>}, {pipeline_mode = #tpu.pipeline_mode<synchronous>, transform_indices = @transform_1, window_bounds = array<i64: 128, 128>}, {pipeline_mode = #tpu.pipeline_mode<synchronous>, transform_indices = @transform_2, window_bounds = array<i64: 1, 128>}, {pipeline_mode = #tpu.pipeline_mode<synchronous>, transform_indices = @transform_3, window_bounds = array<i64: 128, 256>}, {pipeline_mode = #tpu.pipeline_mode<synchronous>, transform_indices = @transform_4, window_bounds = array<i64: 1, 256>}, {pipeline_mode = #tpu.pipeline_mode<synchronous>, transform_indices = @transform_5, window_bounds = array<i64: 256, 128>}, {pipeline_mode = #tpu.pipeline_mode<synchronous>, transform_indices = @transform_6, window_bounds = array<i64: 1, 128>}, {pipeline_mode = #tpu.pipeline_mode<synchronous>, transform_indices = @transform_7, window_bounds = array<i64: 128, 128>}, {pipeline_mode = #tpu.pipeline_mode<synchronous>, transform_indices = @transform_8, window_bounds = array<i64: 1, 128>}, {transform_indices = @transform_9, window_bounds = array<i64: 256, 128>}]} {
    %c0 = arith.constant 0 : index
    %c0_0 = arith.constant 0 : index
    %0 = vector.load %arg1[%c0, %c0_0] : memref<256x128xf32, #tpu.memory_space<vmem>>, vector<256x128xf32>
    %1 = arith.truncf %0 : vector<256x128xf32> to vector<256x128xbf16>
    %c0_1 = arith.constant 0 : index
    %c0_2 = arith.constant 0 : index
    %2 = vector.load %arg2[%c0_1, %c0_2] : memref<128x128xbf16, #tpu.memory_space<vmem>>, vector<128x128xbf16>
    %cst = arith.constant dense<0.000000e+00> : vector<256x128xf32>
    %3 = tpu.matmul %1, %2, %cst {dimension_numbers = #tpu.dot_dimension_numbers<[1], [0], [0], [1], [0, 0, 1, 1], [], []>} : vector<256x128xbf16>, vector<128x128xbf16>, vector<256x128xf32> -> vector<256x128xf32>
    %c0_3 = arith.constant 0 : index
    %c0_4 = arith.constant 0 : index
    %4 = vector.load %arg3[%c0_3, %c0_4] : memref<1x128xf32, #tpu.memory_space<vmem>>, vector<1x128xf32>
    %5 = vector.broadcast %4 : vector<1x128xf32> to vector<256x128xf32>
    %6 = arith.addf %3, %5 : vector<256x128xf32>
    %cst_5 = arith.constant 0.000000e+00 : f32
    %7 = vector.broadcast %cst_5 : f32 to vector<256x128xf32>
    %8 = arith.maximumf %6, %7 : vector<256x128xf32>
    %9 = arith.truncf %8 : vector<256x128xf32> to vector<256x128xbf16>
    %c0_6 = arith.constant 0 : index
    %c0_7 = arith.constant 0 : index
    %10 = vector.load %arg4[%c0_6, %c0_7] : memref<128x256xbf16, #tpu.memory_space<vmem>>, vector<128x256xbf16>
    %cst_8 = arith.constant dense<0.000000e+00> : vector<256x256xf32>
    %11 = tpu.matmul %9, %10, %cst_8 {dimension_numbers = #tpu.dot_dimension_numbers<[1], [0], [0], [1], [0, 0, 1, 1], [], []>} : vector<256x128xbf16>, vector<128x256xbf16>, vector<256x256xf32> -> vector<256x256xf32>
    %c0_9 = arith.constant 0 : index
    %c0_10 = arith.constant 0 : index
    %12 = vector.load %arg5[%c0_9, %c0_10] : memref<1x256xf32, #tpu.memory_space<vmem>>, vector<1x256xf32>
    %13 = vector.broadcast %12 : vector<1x256xf32> to vector<256x256xf32>
    %14 = arith.addf %11, %13 : vector<256x256xf32>
    %cst_11 = arith.constant 0.000000e+00 : f32
    %15 = vector.broadcast %cst_11 : f32 to vector<256x256xf32>
    %16 = arith.maximumf %14, %15 : vector<256x256xf32>
    %17 = arith.truncf %16 : vector<256x256xf32> to vector<256x256xbf16>
    %c0_12 = arith.constant 0 : index
    %c0_13 = arith.constant 0 : index
    %18 = vector.load %arg6[%c0_12, %c0_13] : memref<256x128xbf16, #tpu.memory_space<vmem>>, vector<256x128xbf16>
    %cst_14 = arith.constant dense<0.000000e+00> : vector<256x128xf32>
    %19 = tpu.matmul %17, %18, %cst_14 {dimension_numbers = #tpu.dot_dimension_numbers<[1], [0], [0], [1], [0, 0, 1, 1], [], []>} : vector<256x256xbf16>, vector<256x128xbf16>, vector<256x128xf32> -> vector<256x128xf32>
    %c0_15 = arith.constant 0 : index
    %c0_16 = arith.constant 0 : index
    %20 = vector.load %arg7[%c0_15, %c0_16] : memref<1x128xf32, #tpu.memory_space<vmem>>, vector<1x128xf32>
    %21 = vector.broadcast %20 : vector<1x128xf32> to vector<256x128xf32>
    %22 = arith.addf %19, %21 : vector<256x128xf32>
    %cst_17 = arith.constant 0.000000e+00 : f32
    %23 = vector.broadcast %cst_17 : f32 to vector<256x128xf32>
    %24 = arith.maximumf %22, %23 : vector<256x128xf32>
    %25 = arith.truncf %24 : vector<256x128xf32> to vector<256x128xbf16>
    %c0_18 = arith.constant 0 : index
    %c0_19 = arith.constant 0 : index
    %26 = vector.load %arg8[%c0_18, %c0_19] : memref<128x128xbf16, #tpu.memory_space<vmem>>, vector<128x128xbf16>
    %cst_20 = arith.constant dense<0.000000e+00> : vector<256x128xf32>
    %27 = tpu.matmul %25, %26, %cst_20 {dimension_numbers = #tpu.dot_dimension_numbers<[1], [0], [0], [1], [0, 0, 1, 1], [], []>} : vector<256x128xbf16>, vector<128x128xbf16>, vector<256x128xf32> -> vector<256x128xf32>
    %c0_21 = arith.constant 0 : index
    %c0_22 = arith.constant 0 : index
    %28 = vector.load %arg9[%c0_21, %c0_22] : memref<1x128xf32, #tpu.memory_space<vmem>>, vector<1x128xf32>
    %29 = vector.broadcast %28 : vector<1x128xf32> to vector<256x128xf32>
    %30 = arith.addf %27, %29 : vector<256x128xf32>
    %c0_23 = arith.constant 0 : index
    %c0_24 = arith.constant 0 : index
    %31 = vector.load %arg10[%c0_23, %c0_24] : memref<256x128xf32, #tpu.memory_space<vmem>>, vector<256x128xf32>
    tpu.vector_store %arg10[%c0_23, %c0_24], %30 {strides = array<i32>} : memref<256x128xf32, #tpu.memory_space<vmem>>, vector<256x128xf32>,
    return
  }
  func.func @transform_0(%arg0: i32) -> (i32, i32) {
    %c0_i32 = arith.constant 0 : i32
    %c0_i32_0 = arith.constant 0 : i32
    return %arg0, %c0_i32 : i32, i32
  }
  func.func @transform_1(%arg0: i32) -> (i32, i32) {
    %c0_i32 = arith.constant 0 : i32
    %c0_i32_0 = arith.constant 0 : i32
    %c0_i32_1 = arith.constant 0 : i32
    return %c0_i32, %c0_i32_0 : i32, i32
  }
  func.func @transform_2(%arg0: i32) -> (i32, i32) {
    %c0_i32 = arith.constant 0 : i32
    %c0_i32_0 = arith.constant 0 : i32
    %c0_i32_1 = arith.constant 0 : i32
    return %c0_i32, %c0_i32_0 : i32, i32
  }
  func.func @transform_3(%arg0: i32) -> (i32, i32) {
    %c0_i32 = arith.constant 0 : i32
    %c0_i32_0 = arith.constant 0 : i32
    %c0_i32_1 = arith.constant 0 : i32
    return %c0_i32, %c0_i32_0 : i32, i32
  }
  func.func @transform_4(%arg0: i32) -> (i32, i32) {
    %c0_i32 = arith.constant 0 : i32
    %c0_i32_0 = arith.constant 0 : i32
    %c0_i32_1 = arith.constant 0 : i32
    return %c0_i32, %c0_i32_0 : i32, i32
  }
  func.func @transform_5(%arg0: i32) -> (i32, i32) {
    %c0_i32 = arith.constant 0 : i32
    %c0_i32_0 = arith.constant 0 : i32
    %c0_i32_1 = arith.constant 0 : i32
    return %c0_i32, %c0_i32_0 : i32, i32
  }
  func.func @transform_6(%arg0: i32) -> (i32, i32) {
    %c0_i32 = arith.constant 0 : i32
    %c0_i32_0 = arith.constant 0 : i32
    %c0_i32_1 = arith.constant 0 : i32
    return %c0_i32, %c0_i32_0 : i32, i32
  }
  func.func @transform_7(%arg0: i32) -> (i32, i32) {
    %c0_i32 = arith.constant 0 : i32
    %c0_i32_0 = arith.constant 0 : i32
    %c0_i32_1 = arith.constant 0 : i32
    return %c0_i32, %c0_i32_0 : i32, i32
  }
  func.func @transform_8(%arg0: i32) -> (i32, i32) {
    %c0_i32 = arith.constant 0 : i32
    %c0_i32_0 = arith.constant 0 : i32
    %c0_i32_1 = arith.constant 0 : i32
    return %c0_i32, %c0_i32_0 : i32, i32
  }
  func.func @transform_9(%arg0: i32) -> (i32, i32) {
    %c0_i32 = arith.constant 0 : i32
    %c0_i32_0 = arith.constant 0 : i32
    return %arg0, %c0_i32 : i32, i32
  }
}

</mosaic_0001>

<llo_original>
// kernel: tpu_custom_call.1
$region0: #{tpu_custom_call.1}
  #allocation0 [shape = 'u32[]', space=smem, size = 0x4, offset = 0x4, fixed_abs, tag = 'smem constant byte address 0x4 - core index']
  #allocation1 [shape = 'u32[144,128]{1,0:T(1,128)}', space=vmem, size = 0x12000, scoped, tag = 'internal scratch']
  %s0 = inlined_call_operand.hbm [shape: f32[512,128], index: 0, kind: input, shape index: {}]
  %s1 = inlined_call_operand.hbm [shape: bf16[128,128], index: 1, kind: input, shape index: {}]
  %s2 = inlined_call_operand.vmem [shape: f32[1,128], index: 2, kind: input, shape index: {}]
  %s3 = inlined_call_operand.hbm [shape: bf16[128,256], index: 3, kind: input, shape index: {}]
  %s4 = inlined_call_operand.vmem [shape: f32[1,256], index: 4, kind: input, shape index: {}]
  %s5 = inlined_call_operand.hbm [shape: bf16[256,128], index: 5, kind: input, shape index: {}]
  %s6 = inlined_call_operand.vmem [shape: f32[1,128], index: 6, kind: input, shape index: {}]
  %s7 = inlined_call_operand.hbm [shape: bf16[128,128], index: 7, kind: input, shape index: {}]
  %s8 = inlined_call_operand.vmem [shape: f32[1,128], index: 8, kind: input, shape index: {}]
  %s9 = inlined_call_operand.hbm [shape: f32[512,128], index: 9, kind: output, shape index: {}]
  %s10 = sld [smem:[#allocation0]]
  $region89: #{tpu_custom_call.1} parent=0
    _
  %s12 = ssub.s32 1, %s10
  %s13 = scalar_select 0, %s12, %s10
  $region1: #{tpu_custom_call.1} parent=0
    #allocation2 [shape = 'u8[262144]{0}', space=vmem, size = 0x40000, scoped, tag = 'input window, operand 0']
    #allocation3 [shape = 's32[2]{0}', space=sflag, size = 0x8, scoped, tag = 'scoped memory for tpu_custom_call.1']
    #allocation4 [shape = 's32[2]{0}', space=sflag, size = 0x8, scoped, tag = 'scoped memory for tpu_custom_call.1']
    #allocation5 [shape = 'u8[32768]{0}', space=vmem, size = 0x8000, scoped, tag = 'input window, operand 1, single buffered']
    #allocation6 [shape = 's32[1]{0}', space=sflag, size = 0x4, scoped, tag = 'scoped memory for tpu_custom_call.1']
    #allocation7 [shape = 'u8[65536]{0}', space=vmem, size = 0x10000, scoped, tag = 'input window, operand 3, single buffered']
    #allocation8 [shape = 'u8[65536]{0}', space=vmem, size = 0x10000, scoped, tag = 'input window, operand 5, single buffered']
    #allocation9 [shape = 's32[1]{0}', space=sflag, size = 0x4, scoped, tag = 'scoped memory for tpu_custom_call.1']
    #allocation10 [shape = 'u8[32768]{0}', space=vmem, size = 0x8000, scoped, tag = 'input window, operand 7, single buffered']
    #allocation11 [shape = 'u8[262144]{0}', space=vmem, size = 0x40000, scoped, tag = 'output window, operand 0']
    %14 = vsyncpa [#allocation3], 0
    %s15 = scalar_lea.sflag [#allocation3], 1
    %16 = vsyncpa %s15, 0
    %17 = vsyncpa [#allocation6], 0
    %18 = vsyncpa [#allocation9], 0
    %19 = vsyncpa [#allocation4], 0
    %s20 = scalar_lea.sflag [#allocation4], 1
    %21 = vsyncpa %s20, 0
    loop: start=0, step=1, limit=4
    $region2: #{tpu_custom_call.1} parent=1 // loop_pre_header
      _
    $region3: #{tpu_custom_call.1} parent=1 // loop_header
      %s23 = sphi 0, %s27
      %p24 = scmp.ge.s32.totalorder %s23, 4
      %s33 = sphi 0, %s35
      %s36 = sphi 0, %s33
      %s37 = sphi 0, %s36
      %s53 = sphi 0, %s37
      %s57 = sphi 0, %s57
      %s59 = sphi 0, %s57
      %s60 = sphi 0, %s59
      %s74 = sphi 0, %s60
      %s78 = sphi 0, %s78
      %s80 = sphi 0, %s78
      %s81 = sphi 0, %s80
      %s95 = sphi 0, %s81
      %s99 = sphi 0, %s99
      %s101 = sphi 0, %s99
      %s102 = sphi 0, %s101
      %s116 = sphi 0, %s102
      %s120 = sphi 0, %s120
      %s122 = sphi 0, %s120
      %s123 = sphi 0, %s122
      %s137 = sphi 0, %s123
      %s141 = sphi 0, %s141
      %s143 = sphi 0, %s141
      %s144 = sphi 0, %s143
      %s158 = sphi 0, %s144
      %s162 = sphi 0, %s162
      %s164 = sphi 0, %s162
      %s165 = sphi 0, %s164
      %s179 = sphi 0, %s165
      %s183 = sphi 0, %s183
      %s185 = sphi 0, %s183
      %s186 = sphi 0, %s185
      %s200 = sphi 0, %s186
      %s204 = sphi 0, %s204
      %s206 = sphi 0, %s204
      %s207 = sphi 0, %s206
      %s221 = sphi 0, %s207
      %s227 = sphi 0, %s229
      %s230 = sphi 0, %s227
      %s231 = sphi 0, %s230
      %s247 = sphi 0, %s231
    $region4: #{tpu_custom_call.1} parent=1 // loop_header_branch
      %26 = sbr.rel (%p24) target = $region8
    $region5: #{tpu_custom_call.1} parent=1 // loop_body
      %s28 = ssub.s32 %s23, 1
      %s29 = ssub.s32 %s23, 2
      %s30 = sadd.s32 %s23, 1
      %s31 = ssub.s32 %s23, %s30
      %p32 = scmp.eq.s32.totalorder %s31, 0
      %s34 = sadd.s32 %s33, 1
      %s35 = scalar_select %p32, %s33, %s34
      %p38 = pneg %p32
      %p39 = scmp.eq.s32.totalorder %s23, 1
      %p40 = por %p38, %p39
      %p41 = scmp.ne.s32.totalorder %s33, %s36
      %p42 = scmp.eq.s32.totalorder %s23, 0
      %p43 = por %p41, %p42
      %p44 = scmp.ne.s32.totalorder %s33, %s36
      %p45 = scmp.eq.s32.totalorder %s28, 1
      %p46 = por %p44, %p45
      %p47 = scmp.ne.s32.totalorder %s36, %s37
      %p48 = scmp.eq.s32.totalorder %s28, 0
      %p49 = por %p47, %p48
      %p50 = scmp.ne.s32.totalorder %s36, %s37
      %p51 = scmp.eq.s32.totalorder %s29, 1
      %p52 = por %p50, %p51
      %p54 = scmp.ne.s32.totalorder %s37, %s53
      %p55 = scmp.eq.s32.totalorder %s29, 0
      %p56 = por %p54, %p55
      %s58 = sadd.s32 %s57, 1
      %p61 = scmp.eq.s32.totalorder %s23, 1
      %p62 = scmp.ne.s32.totalorder %s57, %s59
      %p63 = scmp.eq.s32.totalorder %s23, 0
      %p64 = por %p62, %p63
      %p65 = scmp.ne.s32.totalorder %s57, %s59
      %p66 = scmp.eq.s32.totalorder %s28, 1
      %p67 = por %p65, %p66
      %p68 = scmp.ne.s32.totalorder %s59, %s60
      %p69 = scmp.eq.s32.totalorder %s28, 0
      %p70 = por %p68, %p69
      %p71 = scmp.ne.s32.totalorder %s59, %s60
      %p72 = scmp.eq.s32.totalorder %s29, 1
      %p73 = por %p71, %p72
      %p75 = scmp.ne.s32.totalorder %s60, %s74
      %p76 = scmp.eq.s32.totalorder %s29, 0
      %p77 = por %p75, %p76
      %s79 = sadd.s32 %s78, 1
      %p82 = scmp.eq.s32.totalorder %s23, 1
      %p83 = scmp.ne.s32.totalorder %s78, %s80
      %p84 = scmp.eq.s32.totalorder %s23, 0
      %p85 = por %p83, %p84
      %p86 = scmp.ne.s32.totalorder %s78, %s80
      %p87 = scmp.eq.s32.totalorder %s28, 1
      %p88 = por %p86, %p87
      %p89 = scmp.ne.s32.totalorder %s80, %s81
      %p90 = scmp.eq.s32.totalorder %s28, 0
      %p91 = por %p89, %p90
      %p92 = scmp.ne.s32.totalorder %s80, %s81
      %p93 = scmp.eq.s32.totalorder %s29, 1
      %p94 = por %p92, %p93
      %p96 = scmp.ne.s32.totalorder %s81, %s95
      %p97 = scmp.eq.s32.totalorder %s29, 0
      %p98 = por %p96, %p97
      %s100 = sadd.s32 %s99, 1
      %p103 = scmp.eq.s32.totalorder %s23, 1
      %p104 = scmp.ne.s32.totalorder %s99, %s101
      %p105 = scmp.eq.s32.totalorder %s23, 0
      %p106 = por %p104, %p105
      %p107 = scmp.ne.s32.totalorder %s99, %s101
      %p108 = scmp.eq.s32.totalorder %s28, 1
      %p109 = por %p107, %p108
      %p110 = scmp.ne.s32.totalorder %s101, %s102
      %p111 = scmp.eq.s32.totalorder %s28, 0
      %p112 = por %p110, %p111
      %p113 = scmp.ne.s32.totalorder %s101, %s102
      %p114 = scmp.eq.s32.totalorder %s29, 1
      %p115 = por %p113, %p114
      %p117 = scmp.ne.s32.totalorder %s102, %s116
      %p118 = scmp.eq.s32.totalorder %s29, 0
      %p119 = por %p117, %p118
      %s121 = sadd.s32 %s120, 1
      %p124 = scmp.eq.s32.totalorder %s23, 1
      %p125 = scmp.ne.s32.totalorder %s120, %s122
      %p126 = scmp.eq.s32.totalorder %s23, 0
      %p127 = por %p125, %p126
      %p128 = scmp.ne.s32.totalorder %s120, %s122
      %p129 = scmp.eq.s32.totalorder %s28, 1
      %p130 = por %p128, %p129
      %p131 = scmp.ne.s32.totalorder %s122, %s123
      %p132 = scmp.eq.s32.totalorder %s28, 0
      %p133 = por %p131, %p132
      %p134 = scmp.ne.s32.totalorder %s122, %s123
      %p135 = scmp.eq.s32.totalorder %s29, 1
      %p136 = por %p134, %p135
      %p138 = scmp.ne.s32.totalorder %s123, %s137
      %p139 = scmp.eq.s32.totalorder %s29, 0
      %p140 = por %p138, %p139
      %s142 = sadd.s32 %s141, 1
      %p145 = scmp.eq.s32.totalorder %s23, 1
      %p146 = scmp.ne.s32.totalorder %s141, %s143
      %p147 = scmp.eq.s32.totalorder %s23, 0
      %p148 = por %p146, %p147
      %p149 = scmp.ne.s32.totalorder %s141, %s143
      %p150 = scmp.eq.s32.totalorder %s28, 1
      %p151 = por %p149, %p150
      %p152 = scmp.ne.s32.totalorder %s143, %s144
      %p153 = scmp.eq.s32.totalorder %s28, 0
      %p154 = por %p152, %p153
      %p155 = scmp.ne.s32.totalorder %s143, %s144
      %p156 = scmp.eq.s32.totalorder %s29, 1
      %p157 = por %p155, %p156
      %p159 = scmp.ne.s32.totalorder %s144, %s158
      %p160 = scmp.eq.s32.totalorder %s29, 0
      %p161 = por %p159, %p160
      %s163 = sadd.s32 %s162, 1
      %p166 = scmp.eq.s32.totalorder %s23, 1
      %p167 = scmp.ne.s32.totalorder %s162, %s164
      %p168 = scmp.eq.s32.totalorder %s23, 0
      %p169 = por %p167, %p168
      %p170 = scmp.ne.s32.totalorder %s162, %s164
      %p171 = scmp.eq.s32.totalorder %s28, 1
      %p172 = por %p170, %p171
      %p173 = scmp.ne.s32.totalorder %s164, %s165
      %p174 = scmp.eq.s32.totalorder %s28, 0
      %p175 = por %p173, %p174
      %p176 = scmp.ne.s32.totalorder %s164, %s165
      %p177 = scmp.eq.s32.totalorder %s29, 1
      %p178 = por %p176, %p177
      %p180 = scmp.ne.s32.totalorder %s165, %s179
      %p181 = scmp.eq.s32.totalorder %s29, 0
      %p182 = por %p180, %p181
      %s184 = sadd.s32 %s183, 1
      %p187 = scmp.eq.s32.totalorder %s23, 1
      %p188 = scmp.ne.s32.totalorder %s183, %s185
      %p189 = scmp.eq.s32.totalorder %s23, 0
      %p190 = por %p188, %p189
      %p191 = scmp.ne.s32.totalorder %s183, %s185
      %p192 = scmp.eq.s32.totalorder %s28, 1
      %p193 = por %p191, %p192
      %p194 = scmp.ne.s32.totalorder %s185, %s186
      %p195 = scmp.eq.s32.totalorder %s28, 0
      %p196 = por %p194, %p195
      %p197 = scmp.ne.s32.totalorder %s185, %s186
      %p198 = scmp.eq.s32.totalorder %s29, 1
      %p199 = por %p197, %p198
      %p201 = scmp.ne.s32.totalorder %s186, %s200
      %p202 = scmp.eq.s32.totalorder %s29, 0
      %p203 = por %p201, %p202
      %s205 = sadd.s32 %s204, 1
      %p208 = scmp.eq.s32.totalorder %s23, 1
      %p209 = scmp.ne.s32.totalorder %s204, %s206
      %p210 = scmp.eq.s32.totalorder %s23, 0
      %p211 = por %p209, %p210
      %p212 = scmp.ne.s32.totalorder %s204, %s206
      %p213 = scmp.eq.s32.totalorder %s28, 1
      %p214 = por %p212, %p213
      %p215 = scmp.ne.s32.totalorder %s206, %s207
      %p216 = scmp.eq.s32.totalorder %s28, 0
      %p217 = por %p215, %p216
      %p218 = scmp.ne.s32.totalorder %s206, %s207
      %p219 = scmp.eq.s32.totalorder %s29, 1
      %p220 = por %p218, %p219
      %p222 = scmp.ne.s32.totalorder %s207, %s221
      %p223 = scmp.eq.s32.totalorder %s29, 0
      %p224 = por %p222, %p223
      %s225 = ssub.s32 %s23, %s30
      %p226 = scmp.eq.s32.totalorder %s225, 0
      %s228 = sadd.s32 %s227, 1
      %s229 = scalar_select %p226, %s227, %s228
      %p232 = pneg %p226
      %p233 = scmp.eq.s32.totalorder %s23, 1
      %p234 = por %p232, %p233
      %p235 = scmp.ne.s32.totalorder %s227, %s230
      %p236 = scmp.eq.s32.totalorder %s23, 0
      %p237 = por %p235, %p236
      %p238 = scmp.ne.s32.totalorder %s227, %s230
      %p239 = scmp.eq.s32.totalorder %s28, 1
      %p240 = por %p238, %p239
      %p241 = scmp.ne.s32.totalorder %s230, %s231
      %p242 = scmp.eq.s32.totalorder %s28, 0
      %p243 = por %p241, %p242
      %p244 = scmp.ne.s32.totalorder %s230, %s231
      %p245 = scmp.eq.s32.totalorder %s29, 1
      %p246 = por %p244, %p245
      %p248 = scmp.ne.s32.totalorder %s231, %s247
      %p249 = scmp.eq.s32.totalorder %s29, 0
      %p250 = por %p248, %p249
      %p251 = scmp.le.s32.totalorder 1, %s23
      %p252 = scmp.lt.s32.totalorder %s23, 3
      %p253 = pnand %p251, %p252
      %p254 = pneg %p253
      // Predicated region
      $region9: #{tpu_custom_call.1} parent=5 // pred_check
        _
      $region10: #{tpu_custom_call.1} parent=5 // pred_check_branch
        %256 = sbr.rel (%p253) target = $region12
      $region11: #{tpu_custom_call.1} parent=5 // pred_region
        %s257 = ssub.s32 %s23, 1
        // Predicated region
        $region13: #{tpu_custom_call.1} parent=11 // pred_check
          %p258 = pneg %p70
        $region14: #{tpu_custom_call.1} parent=11 // pred_check_branch
          %260 = sbr.rel (%p258) target = $region16
        $region15: #{tpu_custom_call.1} parent=11 // pred_region
          %s262 = ssub.s32 1024, 1024
          %263 = vsyncadd [#allocation6], %s262
          %s264 = sshll.u32 [#allocation5], 4
          %s265 = int_to_ptr.vmem [resolvable:$true] %s264
          %270 = dma.hbm_to_vmem [thread:$0]  %s1, 1024, %s265, [#allocation6], 64, 64, 4
        $region16: #{tpu_custom_call.1} parent=11 // pred_fallthru
          _
        // Predicated region
        $region17: #{tpu_custom_call.1} parent=11 // pred_check
          %p271 = pneg %p91
        $region18: #{tpu_custom_call.1} parent=11 // pred_check_branch
          %273 = sbr.rel (%p271) target = $region20
        $region19: #{tpu_custom_call.1} parent=11 // pred_region
          _
        $region20: #{tpu_custom_call.1} parent=11 // pred_fallthru
          _
        // Predicated region
        $region21: #{tpu_custom_call.1} parent=11 // pred_check
          %p274 = pneg %p112
        $region22: #{tpu_custom_call.1} parent=11 // pred_check_branch
          %276 = sbr.rel (%p274) target = $region24
        $region23: #{tpu_custom_call.1} parent=11 // pred_region
          %s278 = ssub.s32 2048, 2048
          %279 = vsyncadd [#allocation6], %s278
          %s280 = sshll.u32 [#allocation7], 4
          %s281 = int_to_ptr.vmem [resolvable:$true] %s280
          %286 = dma.hbm_to_vmem [thread:$0]  %s3, 2048, %s281, [#allocation6], 128, 128, 8
        $region24: #{tpu_custom_call.1} parent=11 // pred_fallthru
          _
        // Predicated region
        $region25: #{tpu_custom_call.1} parent=11 // pred_check
          %p287 = pneg %p133
        $region26: #{tpu_custom_call.1} parent=11 // pred_check_branch
          %289 = sbr.rel (%p287) target = $region28
        $region27: #{tpu_custom_call.1} parent=11 // pred_region
          _
        $region28: #{tpu_custom_call.1} parent=11 // pred_fallthru
          _
        // Predicated region
        $region29: #{tpu_custom_call.1} parent=11 // pred_check
          %p290 = pneg %p154
        $region30: #{tpu_custom_call.1} parent=11 // pred_check_branch
          %292 = sbr.rel (%p290) target = $region32
        $region31: #{tpu_custom_call.1} parent=11 // pred_region
          %s294 = ssub.s32 2048, 2048
          %295 = vsyncadd [#allocation9], %s294
          %s296 = sshll.u32 [#allocation8], 4
          %s297 = int_to_ptr.vmem [resolvable:$true] %s296
          %302 = dma.hbm_to_vmem [thread:$0]  %s5, 2048, %s297, [#allocation9], 64, 64, 4
        $region32: #{tpu_custom_call.1} parent=11 // pred_fallthru
          _
        // Predicated region
        $region33: #{tpu_custom_call.1} parent=11 // pred_check
          %p303 = pneg %p175
        $region34: #{tpu_custom_call.1} parent=11 // pred_check_branch
          %305 = sbr.rel (%p303) target = $region36
        $region35: #{tpu_custom_call.1} parent=11 // pred_region
          _
        $region36: #{tpu_custom_call.1} parent=11 // pred_fallthru
          _
        // Predicated region
        $region37: #{tpu_custom_call.1} parent=11 // pred_check
          %p306 = pneg %p196
        $region38: #{tpu_custom_call.1} parent=11 // pred_check_branch
          %308 = sbr.rel (%p306) target = $region40
        $region39: #{tpu_custom_call.1} parent=11 // pred_region
          %s310 = ssub.s32 1024, 1024
          %311 = vsyncadd [#allocation9], %s310
          %s312 = sshll.u32 [#allocation10], 4
          %s313 = int_to_ptr.vmem [resolvable:$true] %s312
          %318 = dma.hbm_to_vmem [thread:$0]  %s7, 1024, %s313, [#allocation9], 64, 64, 4
        $region40: #{tpu_custom_call.1} parent=11 // pred_fallthru
          _
        // Predicated region
        $region41: #{tpu_custom_call.1} parent=11 // pred_check
          %p319 = pneg %p217
        $region42: #{tpu_custom_call.1} parent=11 // pred_check_branch
          %321 = sbr.rel (%p319) target = $region44
        $region43: #{tpu_custom_call.1} parent=11 // pred_region
          _
        $region44: #{tpu_custom_call.1} parent=11 // pred_fallthru
          _
      $region12: #{tpu_custom_call.1} parent=5 // pred_fallthru
        _
      %p322 = scmp.lt.s32.totalorder %s23, 2
      // Predicated region
      $region45: #{tpu_custom_call.1} parent=5 // pred_check
        %p323 = pneg %p322
      $region46: #{tpu_custom_call.1} parent=5 // pred_check_branch
        %325 = sbr.rel (%p323) target = $region48
      $region47: #{tpu_custom_call.1} parent=5 // pred_region
        // Predicated region
        $region49: #{tpu_custom_call.1} parent=47 // pred_check
          %p326 = pneg %p43
        $region50: #{tpu_custom_call.1} parent=47 // pred_check_branch
          %328 = sbr.rel (%p326) target = $region52
        $region51: #{tpu_custom_call.1} parent=47 // pred_region
          %s329 = sand.u32 %s33, 1
          %s330 = scalar_lea.sflag [#allocation3], %s329
          %s331 = sand.u32 %s33, 1
          %s332 = smul.addr %s331, 256
          %s333 = scalar_lea.vmem [#allocation2], %s332
          %s334 = smul.u32 32, %s23
          %s336 = ssub.s32 4096, 4096
          %337 = vsyncadd %s330, %s336
          %s338 = smul.addr %s334, 128
          %s339 = scalar_lea.hbm %s0, %s338
          %s340 = sshll.u32 %s333, 4
          %s341 = int_to_ptr.vmem [resolvable:$true] %s340
          %346 = dma.hbm_to_vmem [thread:$0]  %s339, 4096, %s341, %s330, 128, 128, 8
        $region52: #{tpu_custom_call.1} parent=47 // pred_fallthru
          _
      $region48: #{tpu_custom_call.1} parent=5 // pred_fallthru
        _
      %p347 = scmp.le.s32.totalorder 1, %s23
      %p348 = scmp.lt.s32.totalorder %s23, 3
      %p349 = pnand %p347, %p348
      %p350 = pneg %p349
      // Predicated region
      $region53: #{tpu_custom_call.1} parent=5 // pred_check
        _
      $region54: #{tpu_custom_call.1} parent=5 // pred_check_branch
        %352 = sbr.rel (%p349) target = $region56
      $region55: #{tpu_custom_call.1} parent=5 // pred_region
        %s353 = ssub.s32 %s23, 1
        %s354 = sand.u32 %s36, 1
        %s355 = scalar_lea.sflag [#allocation3], %s354
        %s356 = sand.u32 %s36, 1
        %s357 = smul.addr %s356, 256
        %s358 = scalar_lea.vmem [#allocation2], %s357
        // Predicated region
        $region57: #{tpu_custom_call.1} parent=55 // pred_check
          %p359 = pneg %p49
        $region58: #{tpu_custom_call.1} parent=55 // pred_check_branch
          %361 = sbr.rel (%p359) target = $region60
        $region59: #{tpu_custom_call.1} parent=55 // pred_region
          %362 = dma.done %s355, 4096
        $region60: #{tpu_custom_call.1} parent=55 // pred_fallthru
          _
        // Predicated region
        $region61: #{tpu_custom_call.1} parent=55 // pred_check
          %p363 = pneg %p70
        $region62: #{tpu_custom_call.1} parent=55 // pred_check_branch
          %365 = sbr.rel (%p363) target = $region64
        $region63: #{tpu_custom_call.1} parent=55 // pred_region
          %366 = dma.done [#allocation6], 1024
        $region64: #{tpu_custom_call.1} parent=55 // pred_fallthru
          _
        // Predicated region
        $region65: #{tpu_custom_call.1} parent=55 // pred_check
          %p367 = pneg %p112
        $region66: #{tpu_custom_call.1} parent=55 // pred_check_branch
          %369 = sbr.rel (%p367) target = $region68
        $region67: #{tpu_custom_call.1} parent=55 // pred_region
          %370 = dma.done [#allocation6], 2048
        $region68: #{tpu_custom_call.1} parent=55 // pred_fallthru
          _
        // Predicated region
        $region69: #{tpu_custom_call.1} parent=55 // pred_check
          %p371 = pneg %p154
        $region70: #{tpu_custom_call.1} parent=55 // pred_check_branch
          %373 = sbr.rel (%p371) target = $region72
        $region71: #{tpu_custom_call.1} parent=55 // pred_region
          %374 = dma.done [#allocation9], 2048
        $region72: #{tpu_custom_call.1} parent=55 // pred_fallthru
          _
        // Predicated region
        $region73: #{tpu_custom_call.1} parent=55 // pred_check
          %p375 = pneg %p196
        $region74: #{tpu_custom_call.1} parent=55 // pred_check_branch
          %377 = sbr.rel (%p375) target = $region76
        $region75: #{tpu_custom_call.1} parent=55 // pred_region
          %378 = dma.done [#allocation9], 1024
        $region76: #{tpu_custom_call.1} parent=55 // pred_fallthru
          _
        %s379 = sand.u32 %s36, 1
        %s380 = scalar_lea.sflag [#allocation3], %s379
        %s381 = sand.u32 %s36, 1
        %s382 = smul.addr %s381, 256
        %s383 = scalar_lea.vmem [#allocation2], %s382
        %p384 = pneg %p49
        %p385 = pneg %p46
        %p386 = pneg %p70
        %p387 = pneg %p67
        %p388 = pneg %p91
        %p389 = pneg %p88
        %p390 = pneg %p112
        %p391 = pneg %p109
        %p392 = pneg %p133
        %p393 = pneg %p130
        %p394 = pneg %p154
        %p395 = pneg %p151
        %p396 = pneg %p175
        %p397 = pneg %p172
        %p398 = pneg %p196
        %p399 = pneg %p193
        %p400 = pneg %p217
        %p401 = pneg %p214
        %p402 = pneg %p243
        %p403 = pneg %p240
        %s404 = sand.u32 %s230, 1
        %s405 = scalar_lea.sflag [#allocation4], %s404
        %s406 = sand.u32 %s230, 1
        %s407 = smul.addr %s406, 256
        %s408 = scalar_lea.vmem [#allocation11], %s407
        %s409 = smul.u32 32, %s28
        %s410 = smul.u32 32, %s28
        %v412 = vld [vmem:[%s358] sm:$0xff]
        %v413 = vld [vmem:[%s358 + $0x8] sm:$0xff]
        %v414 = vld [vmem:[%s358 + $0x10] sm:$0xff]
        %v415 = vld [vmem:[%s358 + $0x18] sm:$0xff]
        %v416 = vld [vmem:[%s358 + $0x20] sm:$0xff]
        %v417 = vld [vmem:[%s358 + $0x28] sm:$0xff]
        %v418 = vld [vmem:[%s358 + $0x30] sm:$0xff]
        %v419 = vld [vmem:[%s358 + $0x38] sm:$0xff]
        %v420 = vld [vmem:[%s358 + $0x40] sm:$0xff]
        %v421 = vld [vmem:[%s358 + $0x48] sm:$0xff]
        %v422 = vld [vmem:[%s358 + $0x50] sm:$0xff]
        %v423 = vld [vmem:[%s358 + $0x58] sm:$0xff]
        %v424 = vld [vmem:[%s358 + $0x60] sm:$0xff]
        %v425 = vld [vmem:[%s358 + $0x68] sm:$0xff]
        %v426 = vld [vmem:[%s358 + $0x70] sm:$0xff]
        %v427 = vld [vmem:[%s358 + $0x78] sm:$0xff]
        %v428 = vld [vmem:[%s358 + $0x80] sm:$0xff]
        %v429 = vld [vmem:[%s358 + $0x88] sm:$0xff]
        %v430 = vld [vmem:[%s358 + $0x90] sm:$0xff]
        %v431 = vld [vmem:[%s358 + $0x98] sm:$0xff]
        %v432 = vld [vmem:[%s358 + $0xa0] sm:$0xff]
        %v433 = vld [vmem:[%s358 + $0xa8] sm:$0xff]
        %v434 = vld [vmem:[%s358 + $0xb0] sm:$0xff]
        %v435 = vld [vmem:[%s358 + $0xb8] sm:$0xff]
        %v436 = vld [vmem:[%s358 + $0xc0] sm:$0xff]
        %v437 = vld [vmem:[%s358 + $0xc8] sm:$0xff]
        %v438 = vld [vmem:[%s358 + $0xd0] sm:$0xff]
        %v439 = vld [vmem:[%s358 + $0xd8] sm:$0xff]
        %v440 = vld [vmem:[%s358 + $0xe0] sm:$0xff]
        %v441 = vld [vmem:[%s358 + $0xe8] sm:$0xff]
        %v442 = vld [vmem:[%s358 + $0xf0] sm:$0xff]
        %v443 = vld [vmem:[%s358 + $0xf8] sm:$0xff]
        %v444 = vpack.c.bf16 %v413, %v412
        %v445 = vpack.c.bf16 %v415, %v414
        %v446 = vpack.c.bf16 %v417, %v416
        %v447 = vpack.c.bf16 %v419, %v418
        %v448 = vpack.c.bf16 %v421, %v420
        %v449 = vpack.c.bf16 %v423, %v422
        %v450 = vpack.c.bf16 %v425, %v424
        %v451 = vpack.c.bf16 %v427, %v426
        %v452 = vpack.c.bf16 %v429, %v428
        %v453 = vpack.c.bf16 %v431, %v430
        %v454 = vpack.c.bf16 %v433, %v432
        %v455 = vpack.c.bf16 %v435, %v434
        %v456 = vpack.c.bf16 %v437, %v436
        %v457 = vpack.c.bf16 %v439, %v438
        %v458 = vpack.c.bf16 %v441, %v440
        %v459 = vpack.c.bf16 %v443, %v442
        %v460 = vld [vmem:[#allocation5] sm:$0xf]
        %v461 = vld [vmem:[#allocation5 + $0x4] sm:$0xf]
        %v462 = vld [vmem:[#allocation5 + $0x8] sm:$0xf]
        %v463 = vld [vmem:[#allocation5 + $0xc] sm:$0xf]
        %v464 = vld [vmem:[#allocation5 + $0x10] sm:$0xf]
        %v465 = vld [vmem:[#allocation5 + $0x14] sm:$0xf]
        %v466 = vld [vmem:[#allocation5 + $0x18] sm:$0xf]
        %v467 = vld [vmem:[#allocation5 + $0x1c] sm:$0xf]
        %v468 = vld [vmem:[#allocation5 + $0x20] sm:$0xf]
        %v469 = vld [vmem:[#allocation5 + $0x24] sm:$0xf]
        %v470 = vld [vmem:[#allocation5 + $0x28] sm:$0xf]
        %v471 = vld [vmem:[#allocation5 + $0x2c] sm:$0xf]
        %v472 = vld [vmem:[#allocation5 + $0x30] sm:$0xf]
        %v473 = vld [vmem:[#allocation5 + $0x34] sm:$0xf]
        %v474 = vld [vmem:[#allocation5 + $0x38] sm:$0xf]
        %v475 = vld [vmem:[#allocation5 + $0x3c] sm:$0xf]
        %v476 = vld [vmem:[%s2] sm:$0x1]
        %v478 = vlaneseq
        %v479 = vshrl.u32 %v478, 7
        %v480 = vsub.s32 0, %v479
        %v481 = vrot.slane %v476, %v480
        %v499 = vunpack.c.l.b16 %v460
        %v500 = vunpack.c.l.b16 %v461
        %v501 = vunpack.c.l.b16 %v462
        %v502 = vunpack.c.l.b16 %v463
        %v503 = vunpack.c.l.b16 %v464
        %v504 = vunpack.c.l.b16 %v465
        %v505 = vunpack.c.l.b16 %v466
        %v506 = vunpack.c.l.b16 %v467
        %v507 = vunpack.c.l.b16 %v468
        %v508 = vunpack.c.l.b16 %v469
        %v509 = vunpack.c.l.b16 %v470
        %v510 = vunpack.c.l.b16 %v471
        %v511 = vunpack.c.l.b16 %v472
        %v512 = vunpack.c.l.b16 %v473
        %v513 = vunpack.c.l.b16 %v474
        %v514 = vunpack.c.l.b16 %v475
        %v515 = vpack.c.b16 %v500, %v499
        %v516 = vpack.c.b16 %v502, %v501
        %v517 = vpack.c.b16 %v504, %v503
        %v518 = vpack.c.b16 %v506, %v505
        %v519 = vpack.c.b16 %v508, %v507
        %v520 = vpack.c.b16 %v510, %v509
        %v521 = vpack.c.b16 %v512, %v511
        %v522 = vpack.c.b16 %v514, %v513
        %531 = vmatprep.subr.bf16.mxu0 0
        %532 = vmatpush1.bf16.msra.mxu0 %v515
        %533 = vmatprep.subr.bf16.mxu0 0
        %534 = vmatpush1.bf16.msra.mxu0 %v516
        %535 = vmatprep.subr.bf16.mxu0 0
        %536 = vmatpush1.bf16.msra.mxu0 %v517
        %537 = vmatprep.subr.bf16.mxu0 0
        %538 = vmatpush1.bf16.msra.mxu0 %v518
        %539 = vmatprep.subr.bf16.mxu0 0
        %540 = vmatpush1.bf16.msra.mxu0 %v519
        %541 = vmatprep.subr.bf16.mxu0 0
        %542 = vmatpush1.bf16.msra.mxu0 %v520
        %543 = vmatprep.subr.bf16.mxu0 0
        %544 = vmatpush1.bf16.msra.mxu0 %v521
        %545 = vmatprep.subr.bf16.mxu0 0
        %546 = vmatpush1.bf16.msra.mxu0 %v522
        %547 = vmatprep.subr.bf16.mxu0 0
        %548 = vmatpush1.bf16.msra.mxu0 0
        %549 = vmatprep.subr.bf16.mxu0 0
        %550 = vmatpush1.bf16.msra.mxu0 0
        %551 = vmatprep.subr.bf16.mxu0 0
        %552 = vmatpush1.bf16.msra.mxu0 0
        %553 = vmatprep.subr.bf16.mxu0 0
        %554 = vmatpush1.bf16.msra.mxu0 0
        %555 = vmatprep.subr.bf16.mxu0 0
        %556 = vmatpush1.bf16.msra.mxu0 0
        %557 = vmatprep.subr.bf16.mxu0 0
        %558 = vmatpush1.bf16.msra.mxu0 0
        %559 = vmatprep.subr.bf16.mxu0 0
        %560 = vmatpush1.bf16.msra.mxu0 0
        %561 = vmatprep.subr.bf16.mxu0 0
        %562 = vmatpush1.bf16.msra.mxu0 0
        %563 = vmatprep.mubr.bf16.mxu0 0
        %564 = vmatmul.mubr.bf16.gmra.mrb[0].mxu0 %v444
        %v565 = vpop.f32.mrb[0].mxu0
        %v566 = vadd.f32 %v481, %v565
        %v567 = vpop.f32.mrb[0].mxu0
        %v568 = vpop.f32.mrb[0].mxu0
        %v569 = vadd.f32 %v481, %v568
        %v570 = vpop.f32.mrb[0].mxu0
        %571 = vmatprep.mubr.bf16.mxu0 0
        %572 = vmatmul.mubr.bf16.gmra.mrb[0].mxu0 %v445
        %v573 = vpop.f32.mrb[0].mxu0
        %v574 = vadd.f32 %v481, %v573
        %v575 = vpop.f32.mrb[0].mxu0
        %v576 = vpop.f32.mrb[0].mxu0
        %v577 = vadd.f32 %v481, %v576
        %v578 = vpop.f32.mrb[0].mxu0
        %579 = vmatprep.mubr.bf16.mxu0 0
        %580 = vmatmul.mubr.bf16.gmra.mrb[0].mxu0 %v446
        %v581 = vpop.f32.mrb[0].mxu0
        %v582 = vadd.f32 %v481, %v581
        %v583 = vpop.f32.mrb[0].mxu0
        %v584 = vpop.f32.mrb[0].mxu0
        %v585 = vadd.f32 %v481, %v584
        %v586 = vpop.f32.mrb[0].mxu0
        %587 = vmatprep.mubr.bf16.mxu0 0
        %588 = vmatmul.mubr.bf16.gmra.mrb[0].mxu0 %v447
        %v589 = vpop.f32.mrb[0].mxu0
        %v590 = vadd.f32 %v481, %v589
        %v591 = vpop.f32.mrb[0].mxu0
        %v592 = vpop.f32.mrb[0].mxu0
        %v593 = vadd.f32 %v481, %v592
        %v594 = vpop.f32.mrb[0].mxu0
        %595 = vmatprep.mubr.bf16.mxu0 0
        %596 = vmatmul.mubr.bf16.gmra.mrb[0].mxu0 %v448
        %v597 = vpop.f32.mrb[0].mxu0
        %v598 = vadd.f32 %v481, %v597
        %v599 = vpop.f32.mrb[0].mxu0
        %v600 = vpop.f32.mrb[0].mxu0
        %v601 = vadd.f32 %v481, %v600
        %v602 = vpop.f32.mrb[0].mxu0
        %603 = vmatprep.mubr.bf16.mxu0 0
        %604 = vmatmul.mubr.bf16.gmra.mrb[0].mxu0 %v449
        %v605 = vpop.f32.mrb[0].mxu0
        %v606 = vadd.f32 %v481, %v605
        %v607 = vpop.f32.mrb[0].mxu0
        %v608 = vpop.f32.mrb[0].mxu0
        %v609 = vadd.f32 %v481, %v608
        %v610 = vpop.f32.mrb[0].mxu0
        %611 = vmatprep.mubr.bf16.mxu0 0
        %612 = vmatmul.mubr.bf16.gmra.mrb[0].mxu0 %v450
        %v613 = vpop.f32.mrb[0].mxu0
        %v614 = vadd.f32 %v481, %v613
        %v615 = vpop.f32.mrb[0].mxu0
        %v616 = vpop.f32.mrb[0].mxu0
        %v617 = vadd.f32 %v481, %v616
        %v618 = vpop.f32.mrb[0].mxu0
        %619 = vmatprep.mubr.bf16.mxu0 0
        %620 = vmatmul.mubr.bf16.gmra.mrb[0].mxu0 %v451
        %v621 = vpop.f32.mrb[0].mxu0
        %v622 = vadd.f32 %v481, %v621
        %v623 = vpop.f32.mrb[0].mxu0
        %v624 = vpop.f32.mrb[0].mxu0
        %v625 = vadd.f32 %v481, %v624
        %v626 = vpop.f32.mrb[0].mxu0
        %627 = vmatprep.mubr.bf16.mxu0 0
        %628 = vmatmul.mubr.bf16.gmra.mrb[0].mxu0 %v452
        %v629 = vpop.f32.mrb[0].mxu0
        %v630 = vadd.f32 %v481, %v629
        %v631 = vpop.f32.mrb[0].mxu0
        %v632 = vpop.f32.mrb[0].mxu0
        %v633 = vadd.f32 %v481, %v632
        %v634 = vpop.f32.mrb[0].mxu0
        %635 = vmatprep.mubr.bf16.mxu0 0
        %636 = vmatmul.mubr.bf16.gmra.mrb[0].mxu0 %v453
        %v637 = vpop.f32.mrb[0].mxu0
        %v638 = vadd.f32 %v481, %v637
        %v639 = vpop.f32.mrb[0].mxu0
        %v640 = vpop.f32.mrb[0].mxu0
        %v641 = vadd.f32 %v481, %v640
        %v642 = vpop.f32.mrb[0].mxu0
        %643 = vmatprep.mubr.bf16.mxu0 0
        %644 = vmatmul.mubr.bf16.gmra.mrb[0].mxu0 %v454
        %v645 = vpop.f32.mrb[0].mxu0
        %v646 = vadd.f32 %v481, %v645
        %v647 = vpop.f32.mrb[0].mxu0
        %v648 = vpop.f32.mrb[0].mxu0
        %v649 = vadd.f32 %v481, %v648
        %v650 = vpop.f32.mrb[0].mxu0
        %651 = vmatprep.mubr.bf16.mxu0 0
        %652 = vmatmul.mubr.bf16.gmra.mrb[0].mxu0 %v455
        %v653 = vpop.f32.mrb[0].mxu0
        %v654 = vadd.f32 %v481, %v653
        %v655 = vpop.f32.mrb[0].mxu0
        %v656 = vpop.f32.mrb[0].mxu0
        %v657 = vadd.f32 %v481, %v656
        %v658 = vpop.f32.mrb[0].mxu0
        %659 = vmatprep.mubr.bf16.mxu0 0
        %660 = vmatmul.mubr.bf16.gmra.mrb[0].mxu0 %v456
        %v661 = vpop.f32.mrb[0].mxu0
        %v662 = vadd.f32 %v481, %v661
        %v663 = vpop.f32.mrb[0].mxu0
        %v664 = vpop.f32.mrb[0].mxu0
        %v665 = vadd.f32 %v481, %v664
        %v666 = vpop.f32.mrb[0].mxu0
        %667 = vmatprep.mubr.bf16.mxu0 0
        %668 = vmatmul.mubr.bf16.gmra.mrb[0].mxu0 %v457
        %v669 = vpop.f32.mrb[0].mxu0
        %v670 = vadd.f32 %v481, %v669
        %v671 = vpop.f32.mrb[0].mxu0
        %v672 = vpop.f32.mrb[0].mxu0
        %v673 = vadd.f32 %v481, %v672
        %v674 = vpop.f32.mrb[0].mxu0
        %675 = vmatprep.mubr.bf16.mxu0 0
        %676 = vmatmul.mubr.bf16.gmra.mrb[0].mxu0 %v458
        %v677 = vpop.f32.mrb[0].mxu0
        %v678 = vadd.f32 %v481, %v677
        %v679 = vpop.f32.mrb[0].mxu0
        %v680 = vpop.f32.mrb[0].mxu0
        %v681 = vadd.f32 %v481, %v680
        %v682 = vpop.f32.mrb[0].mxu0
        %683 = vmatprep.mubr.bf16.mxu0 0
        %684 = vmatmul.mubr.bf16.gmra.mrb[0].mxu0 %v459
        %v685 = vpop.f32.mrb[0].mxu0
        %v686 = vadd.f32 %v481, %v685
        %v687 = vpop.f32.mrb[0].mxu0
        %v688 = vpop.f32.mrb[0].mxu0
        %v689 = vadd.f32 %v481, %v688
        %v690 = vpop.f32.mrb[0].mxu0
        %691 = vdwg.mxu0
        %v692 = vmax.f32 %v566, 0.0
        %v693 = vmax.f32 %v569, 0.0
        %v694 = vmax.f32 %v574, 0.0
        %v695 = vmax.f32 %v577, 0.0
        %v696 = vmax.f32 %v582, 0.0
        %v697 = vmax.f32 %v585, 0.0
        %v698 = vmax.f32 %v590, 0.0
        %v699 = vmax.f32 %v593, 0.0
        %v700 = vmax.f32 %v598, 0.0
        %v701 = vmax.f32 %v601, 0.0
        %v702 = vmax.f32 %v606, 0.0
        %v703 = vmax.f32 %v609, 0.0
        %v704 = vmax.f32 %v614, 0.0
        %v705 = vmax.f32 %v617, 0.0
        %v706 = vmax.f32 %v622, 0.0
        %v707 = vmax.f32 %v625, 0.0
        %v708 = vmax.f32 %v630, 0.0
        %v709 = vmax.f32 %v633, 0.0
        %v710 = vmax.f32 %v638, 0.0
        %v711 = vmax.f32 %v641, 0.0
        %v712 = vmax.f32 %v646, 0.0
        %v713 = vmax.f32 %v649, 0.0
        %v714 = vmax.f32 %v654, 0.0
        %v715 = vmax.f32 %v657, 0.0
        %v716 = vmax.f32 %v662, 0.0
        %v717 = vmax.f32 %v665, 0.0
        %v718 = vmax.f32 %v670, 0.0
        %v719 = vmax.f32 %v673, 0.0
        %v720 = vmax.f32 %v678, 0.0
        %v721 = vmax.f32 %v681, 0.0
        %v722 = vmax.f32 %v686, 0.0
        %v723 = vmax.f32 %v689, 0.0
        %v724 = vpack.c.bf16 %v693, %v692
        %v725 = vpack.c.bf16 %v695, %v694
        %v726 = vpack.c.bf16 %v697, %v696
        %v727 = vpack.c.bf16 %v699, %v698
        %v728 = vpack.c.bf16 %v701, %v700
        %v729 = vpack.c.bf16 %v703, %v702
        %v730 = vpack.c.bf16 %v705, %v704
        %v731 = vpack.c.bf16 %v707, %v706
        %v732 = vpack.c.bf16 %v709, %v708
        %v733 = vpack.c.bf16 %v711, %v710
        %v734 = vpack.c.bf16 %v713, %v712
        %v735 = vpack.c.bf16 %v715, %v714
        %v736 = vpack.c.bf16 %v717, %v716
        %v737 = vpack.c.bf16 %v719, %v718
        %v738 = vpack.c.bf16 %v721, %v720
        %v739 = vpack.c.bf16 %v723, %v722
        %v740 = vld [vmem:[#allocation7] sm:$0xff]
        %v741 = vld [vmem:[#allocation7 + $0x8] sm:$0xff]
        %v742 = vld [vmem:[#allocation7 + $0x10] sm:$0xff]
        %v743 = vld [vmem:[#allocation7 + $0x18] sm:$0xff]
        %v744 = vld [vmem:[#allocation7 + $0x20] sm:$0xff]
        %v745 = vld [vmem:[#allocation7 + $0x28] sm:$0xff]
        %v746 = vld [vmem:[#allocation7 + $0x30] sm:$0xff]
        %v747 = vld [vmem:[#allocation7 + $0x38] sm:$0xff]
        %v748 = vld [vmem:[#allocation7 + $0x40] sm:$0xff]
        %v749 = vld [vmem:[#allocation7 + $0x48] sm:$0xff]
        %v750 = vld [vmem:[#allocation7 + $0x50] sm:$0xff]
        %v751 = vld [vmem:[#allocation7 + $0x58] sm:$0xff]
        %v752 = vld [vmem:[#allocation7 + $0x60] sm:$0xff]
        %v753 = vld [vmem:[#allocation7 + $0x68] sm:$0xff]
        %v754 = vld [vmem:[#allocation7 + $0x70] sm:$0xff]
        %v755 = vld [vmem:[#allocation7 + $0x78] sm:$0xff]
        %v756 = vld [vmem:[%s4] sm:$0x3]
        %v758 = vlaneseq
        %v759 = vshrl.u32 %v758, 7
        %v760 = vsub.s32 0, %v759
        %v761 = vrot.slane %v756, %v760
        %v762 = vlaneseq
        %v763 = vshrl.u32 %v762, 7
        %v764 = vsub.s32 1, %v763
        %v765 = vrot.slane %v756, %v764
        %v784 = vunpack.c.l.b16 %v740
        %v785 = vunpack.c.h.b16 %v740
        %v786 = vunpack.c.l.b16 %v741
        %v787 = vunpack.c.h.b16 %v741
        %v788 = vunpack.c.l.b16 %v742
        %v789 = vunpack.c.h.b16 %v742
        %v790 = vunpack.c.l.b16 %v743
        %v791 = vunpack.c.h.b16 %v743
        %v792 = vunpack.c.l.b16 %v744
        %v793 = vunpack.c.h.b16 %v744
        %v794 = vunpack.c.l.b16 %v745
        %v795 = vunpack.c.h.b16 %v745
        %v796 = vunpack.c.l.b16 %v746
        %v797 = vunpack.c.h.b16 %v746
        %v798 = vunpack.c.l.b16 %v747
        %v799 = vunpack.c.h.b16 %v747
        %v800 = vunpack.c.l.b16 %v748
        %v801 = vunpack.c.h.b16 %v748
        %v802 = vunpack.c.l.b16 %v749
        %v803 = vunpack.c.h.b16 %v749
        %v804 = vunpack.c.l.b16 %v750
        %v805 = vunpack.c.h.b16 %v750
        %v806 = vunpack.c.l.b16 %v751
        %v807 = vunpack.c.h.b16 %v751
        %v808 = vunpack.c.l.b16 %v752
        %v809 = vunpack.c.h.b16 %v752
        %v810 = vunpack.c.l.b16 %v753
        %v811 = vunpack.c.h.b16 %v753
        %v812 = vunpack.c.l.b16 %v754
        %v813 = vunpack.c.h.b16 %v754
        %v814 = vunpack.c.l.b16 %v755
        %v815 = vunpack.c.h.b16 %v755
        %v816 = vpack.c.b16 %v786, %v784
        %v817 = vpack.c.b16 %v787, %v785
        %v818 = vpack.c.b16 %v790, %v788
        %v819 = vpack.c.b16 %v791, %v789
        %v820 = vpack.c.b16 %v794, %v792
        %v821 = vpack.c.b16 %v795, %v793
        %v822 = vpack.c.b16 %v798, %v796
        %v823 = vpack.c.b16 %v799, %v797
        %v824 = vpack.c.b16 %v802, %v800
        %v825 = vpack.c.b16 %v803, %v801
        %v826 = vpack.c.b16 %v806, %v804
        %v827 = vpack.c.b16 %v807, %v805
        %v828 = vpack.c.b16 %v810, %v808
        %v829 = vpack.c.b16 %v811, %v809
        %v830 = vpack.c.b16 %v814, %v812
        %v831 = vpack.c.b16 %v815, %v813
        %848 = vmatprep.subr.bf16.mxu0 %v817
        %849 = vmatpush1.bf16.msra.mxu0 %v816
        %850 = vmatprep.subr.bf16.mxu0 %v819
        %851 = vmatpush1.bf16.msra.mxu0 %v818
        %852 = vmatprep.subr.bf16.mxu0 %v821
        %853 = vmatpush1.bf16.msra.mxu0 %v820
        %854 = vmatprep.subr.bf16.mxu0 %v823
        %855 = vmatpush1.bf16.msra.mxu0 %v822
        %856 = vmatprep.subr.bf16.mxu0 %v825
        %857 = vmatpush1.bf16.msra.mxu0 %v824
        %858 = vmatprep.subr.bf16.mxu0 %v827
        %859 = vmatpush1.bf16.msra.mxu0 %v826
        %860 = vmatprep.subr.bf16.mxu0 %v829
        %861 = vmatpush1.bf16.msra.mxu0 %v828
        %862 = vmatprep.subr.bf16.mxu0 %v831
        %863 = vmatpush1.bf16.msra.mxu0 %v830
        %864 = vmatprep.subr.bf16.mxu0 0
        %865 = vmatpush1.bf16.msra.mxu0 0
        %866 = vmatprep.subr.bf16.mxu0 0
        %867 = vmatpush1.bf16.msra.mxu0 0
        %868 = vmatprep.subr.bf16.mxu0 0
        %869 = vmatpush1.bf16.msra.mxu0 0
        %870 = vmatprep.subr.bf16.mxu0 0
        %871 = vmatpush1.bf16.msra.mxu0 0
        %872 = vmatprep.subr.bf16.mxu0 0
        %873 = vmatpush1.bf16.msra.mxu0 0
        %874 = vmatprep.subr.bf16.mxu0 0
        %875 = vmatpush1.bf16.msra.mxu0 0
        %876 = vmatprep.subr.bf16.mxu0 0
        %877 = vmatpush1.bf16.msra.mxu0 0
        %878 = vmatprep.subr.bf16.mxu0 0
        %879 = vmatpush1.bf16.msra.mxu0 0
        %880 = vmatprep.mubr.bf16.mxu0 0
        %881 = vmatmul.mubr.bf16.gmra.mrb[0].mxu0 %v724
        %v882 = vpop.f32.mrb[0].mxu0
        %v883 = vadd.f32 %v761, %v882
        %v884 = vpop.f32.mrb[0].mxu0
        %v885 = vadd.f32 %v765, %v884
        %v886 = vpop.f32.mrb[0].mxu0
        %v887 = vadd.f32 %v761, %v886
        %v888 = vpop.f32.mrb[0].mxu0
        %v889 = vadd.f32 %v765, %v888
        %890 = vmatprep.mubr.bf16.mxu0 0
        %891 = vmatmul.mubr.bf16.gmra.mrb[0].mxu0 %v725
        %v892 = vpop.f32.mrb[0].mxu0
        %v893 = vadd.f32 %v761, %v892
        %v894 = vpop.f32.mrb[0].mxu0
        %v895 = vadd.f32 %v765, %v894
        %v896 = vpop.f32.mrb[0].mxu0
        %v897 = vadd.f32 %v761, %v896
        %v898 = vpop.f32.mrb[0].mxu0
        %v899 = vadd.f32 %v765, %v898
        %900 = vmatprep.mubr.bf16.mxu0 0
        %901 = vmatmul.mubr.bf16.gmra.mrb[0].mxu0 %v726
        %v902 = vpop.f32.mrb[0].mxu0
        %v903 = vadd.f32 %v761, %v902
        %v904 = vpop.f32.mrb[0].mxu0
        %v905 = vadd.f32 %v765, %v904
        %v906 = vpop.f32.mrb[0].mxu0
        %v907 = vadd.f32 %v761, %v906
        %v908 = vpop.f32.mrb[0].mxu0
        %v909 = vadd.f32 %v765, %v908
        %910 = vmatprep.mubr.bf16.mxu0 0
        %911 = vmatmul.mubr.bf16.gmra.mrb[0].mxu0 %v727
        %v912 = vpop.f32.mrb[0].mxu0
        %v913 = vadd.f32 %v761, %v912
        %v914 = vpop.f32.mrb[0].mxu0
        %v915 = vadd.f32 %v765, %v914
        %v916 = vpop.f32.mrb[0].mxu0
        %v917 = vadd.f32 %v761, %v916
        %v918 = vpop.f32.mrb[0].mxu0
        %v919 = vadd.f32 %v765, %v918
        %920 = vmatprep.mubr.bf16.mxu0 0
        %921 = vmatmul.mubr.bf16.gmra.mrb[0].mxu0 %v728
        %v922 = vpop.f32.mrb[0].mxu0
        %v923 = vadd.f32 %v761, %v922
        %v924 = vpop.f32.mrb[0].mxu0
        %v925 = vadd.f32 %v765, %v924
        %v926 = vpop.f32.mrb[0].mxu0
        %v927 = vadd.f32 %v761, %v926
        %v928 = vpop.f32.mrb[0].mxu0
        %v929 = vadd.f32 %v765, %v928
        %930 = vmatprep.mubr.bf16.mxu0 0
        %931 = vmatmul.mubr.bf16.gmra.mrb[0].mxu0 %v729
        %v932 = vpop.f32.mrb[0].mxu0
        %v933 = vadd.f32 %v761, %v932
        %v934 = vpop.f32.mrb[0].mxu0
        %v935 = vadd.f32 %v765, %v934
        %v936 = vpop.f32.mrb[0].mxu0
        %v937 = vadd.f32 %v761, %v936
        %v938 = vpop.f32.mrb[0].mxu0
        %v939 = vadd.f32 %v765, %v938
        %940 = vmatprep.mubr.bf16.mxu0 0
        %941 = vmatmul.mubr.bf16.gmra.mrb[0].mxu0 %v730
        %v942 = vpop.f32.mrb[0].mxu0
        %v943 = vadd.f32 %v761, %v942
        %v944 = vpop.f32.mrb[0].mxu0
        %v945 = vadd.f32 %v765, %v944
        %v946 = vpop.f32.mrb[0].mxu0
        %v947 = vadd.f32 %v761, %v946
        %v948 = vpop.f32.mrb[0].mxu0
        %v949 = vadd.f32 %v765, %v948
        %950 = vmatprep.mubr.bf16.mxu0 0
        %951 = vmatmul.mubr.bf16.gmra.mrb[0].mxu0 %v731
        %v952 = vpop.f32.mrb[0].mxu0
        %v953 = vadd.f32 %v761, %v952
        %v954 = vpop.f32.mrb[0].mxu0
        %v955 = vadd.f32 %v765, %v954
        %v956 = vpop.f32.mrb[0].mxu0
        %v957 = vadd.f32 %v761, %v956
        %v958 = vpop.f32.mrb[0].mxu0
        %v959 = vadd.f32 %v765, %v958
        %960 = vmatprep.mubr.bf16.mxu0 0
        %961 = vmatmul.mubr.bf16.gmra.mrb[0].mxu0 %v732
        %v962 = vpop.f32.mrb[0].mxu0
        %v963 = vadd.f32 %v761, %v962
        %v964 = vpop.f32.mrb[0].mxu0
        %v965 = vadd.f32 %v765, %v964
        %v966 = vpop.f32.mrb[0].mxu0
        %v967 = vadd.f32 %v761, %v966
        %v968 = vpop.f32.mrb[0].mxu0
        %v969 = vadd.f32 %v765, %v968
        %970 = vmatprep.mubr.bf16.mxu0 0
        %971 = vmatmul.mubr.bf16.gmra.mrb[0].mxu0 %v733
        %v972 = vpop.f32.mrb[0].mxu0
        %v973 = vadd.f32 %v761, %v972
        %v974 = vpop.f32.mrb[0].mxu0
        %v975 = vadd.f32 %v765, %v974
        %v976 = vpop.f32.mrb[0].mxu0
        %v977 = vadd.f32 %v761, %v976
        %v978 = vpop.f32.mrb[0].mxu0
        %v979 = vadd.f32 %v765, %v978
        %980 = vmatprep.mubr.bf16.mxu0 0
        %981 = vmatmul.mubr.bf16.gmra.mrb[0].mxu0 %v734
        %v982 = vpop.f32.mrb[0].mxu0
        %v983 = vadd.f32 %v761, %v982
        %v984 = vpop.f32.mrb[0].mxu0
        %v985 = vadd.f32 %v765, %v984
        %v986 = vpop.f32.mrb[0].mxu0
        %v987 = vadd.f32 %v761, %v986
        %v988 = vpop.f32.mrb[0].mxu0
        %v989 = vadd.f32 %v765, %v988
        %990 = vmatprep.mubr.bf16.mxu0 0
        %991 = vmatmul.mubr.bf16.gmra.mrb[0].mxu0 %v735
        %v992 = vpop.f32.mrb[0].mxu0
        %v993 = vadd.f32 %v761, %v992
        %v994 = vpop.f32.mrb[0].mxu0
        %v995 = vadd.f32 %v765, %v994
        %v996 = vpop.f32.mrb[0].mxu0
        %v997 = vadd.f32 %v761, %v996
        %v998 = vpop.f32.mrb[0].mxu0
        %v999 = vadd.f32 %v765, %v998
        %1000 = vmatprep.mubr.bf16.mxu0 0
        %1001 = vmatmul.mubr.bf16.gmra.mrb[0].mxu0 %v736
        %v1002 = vpop.f32.mrb[0].mxu0
        %v1003 = vadd.f32 %v761, %v1002
        %v1004 = vpop.f32.mrb[0].mxu0
        %v1005 = vadd.f32 %v765, %v1004
        %v1006 = vpop.f32.mrb[0].mxu0
        %v1007 = vadd.f32 %v761, %v1006
        %v1008 = vpop.f32.mrb[0].mxu0
        %v1009 = vadd.f32 %v765, %v1008
        %1010 = vmatprep.mubr.bf16.mxu0 0
        %1011 = vmatmul.mubr.bf16.gmra.mrb[0].mxu0 %v737
        %v1012 = vpop.f32.mrb[0].mxu0
        %v1013 = vadd.f32 %v761, %v1012
        %v1014 = vpop.f32.mrb[0].mxu0
        %v1015 = vadd.f32 %v765, %v1014
        %v1016 = vpop.f32.mrb[0].mxu0
        %v1017 = vadd.f32 %v761, %v1016
        %v1018 = vpop.f32.mrb[0].mxu0
        %v1019 = vadd.f32 %v765, %v1018
        %1020 = vmatprep.mubr.bf16.mxu0 0
        %1021 = vmatmul.mubr.bf16.gmra.mrb[0].mxu0 %v738
        %v1022 = vpop.f32.mrb[0].mxu0
        %v1023 = vadd.f32 %v761, %v1022
        %v1024 = vpop.f32.mrb[0].mxu0
        %v1025 = vadd.f32 %v765, %v1024
        %v1026 = vpop.f32.mrb[0].mxu0
        %v1027 = vadd.f32 %v761, %v1026
        %v1028 = vpop.f32.mrb[0].mxu0
        %v1029 = vadd.f32 %v765, %v1028
        %1030 = vmatprep.mubr.bf16.mxu0 0
        %1031 = vmatmul.mubr.bf16.gmra.mrb[0].mxu0 %v739
        %v1032 = vpop.f32.mrb[0].mxu0
        %v1033 = vadd.f32 %v761, %v1032
        %v1034 = vpop.f32.mrb[0].mxu0
        %v1035 = vadd.f32 %v765, %v1034
        %v1036 = vpop.f32.mrb[0].mxu0
        %v1037 = vadd.f32 %v761, %v1036
        %v1038 = vpop.f32.mrb[0].mxu0
        %v1039 = vadd.f32 %v765, %v1038
        %1040 = vdwg.mxu0
        %v1041 = vmax.f32 %v883, 0.0
        %v1042 = vmax.f32 %v885, 0.0
        %v1043 = vmax.f32 %v887, 0.0
        %v1044 = vmax.f32 %v889, 0.0
        %v1045 = vmax.f32 %v893, 0.0
        %v1046 = vmax.f32 %v895, 0.0
        %v1047 = vmax.f32 %v897, 0.0
        %v1048 = vmax.f32 %v899, 0.0
        %v1049 = vmax.f32 %v903, 0.0
        %v1050 = vmax.f32 %v905, 0.0
        %v1051 = vmax.f32 %v907, 0.0
        %v1052 = vmax.f32 %v909, 0.0
        %v1053 = vmax.f32 %v913, 0.0
        %v1054 = vmax.f32 %v915, 0.0
        %v1055 = vmax.f32 %v917, 0.0
        %v1056 = vmax.f32 %v919, 0.0
        %v1057 = vmax.f32 %v923, 0.0
        %v1058 = vmax.f32 %v925, 0.0
        %v1059 = vmax.f32 %v927, 0.0
        %v1060 = vmax.f32 %v929, 0.0
        %v1061 = vmax.f32 %v933, 0.0
        %v1062 = vmax.f32 %v935, 0.0
        %v1063 = vmax.f32 %v937, 0.0
        %v1064 = vmax.f32 %v939, 0.0
        %v1065 = vmax.f32 %v943, 0.0
        %v1066 = vmax.f32 %v945, 0.0
        %v1067 = vmax.f32 %v947, 0.0
        %v1068 = vmax.f32 %v949, 0.0
        %v1069 = vmax.f32 %v953, 0.0
        %v1070 = vmax.f32 %v955, 0.0
        %v1071 = vmax.f32 %v957, 0.0
        %v1072 = vmax.f32 %v959, 0.0
        %v1073 = vmax.f32 %v963, 0.0
        %v1074 = vmax.f32 %v965, 0.0
        %v1075 = vmax.f32 %v967, 0.0
        %v1076 = vmax.f32 %v969, 0.0
        %v1077 = vmax.f32 %v973, 0.0
        %v1078 = vmax.f32 %v975, 0.0
        %v1079 = vmax.f32 %v977, 0.0
        %v1080 = vmax.f32 %v979, 0.0
        %v1081 = vmax.f32 %v983, 0.0
        %v1082 = vmax.f32 %v985, 0.0
        %v1083 = vmax.f32 %v987, 0.0
        %v1084 = vmax.f32 %v989, 0.0
        %v1085 = vmax.f32 %v993, 0.0
        %v1086 = vmax.f32 %v995, 0.0
        %v1087 = vmax.f32 %v997, 0.0
        %v1088 = vmax.f32 %v999, 0.0
        %v1089 = vmax.f32 %v1003, 0.0
        %v1090 = vmax.f32 %v1005, 0.0
        %v1091 = vmax.f32 %v1007, 0.0
        %v1092 = vmax.f32 %v1009, 0.0
        %v1093 = vmax.f32 %v1013, 0.0
        %v1094 = vmax.f32 %v1015, 0.0
        %v1095 = vmax.f32 %v1017, 0.0
        %v1096 = vmax.f32 %v1019, 0.0
        %v1097 = vmax.f32 %v1023, 0.0
        %v1098 = vmax.f32 %v1025, 0.0
        %v1099 = vmax.f32 %v1027, 0.0
        %v1100 = vmax.f32 %v1029, 0.0
        %v1101 = vmax.f32 %v1033, 0.0
        %v1102 = vmax.f32 %v1035, 0.0
        %v1103 = vmax.f32 %v1037, 0.0
        %v1104 = vmax.f32 %v1039, 0.0
        %v1105 = vpack.c.bf16 %v1043, %v1041
        %v1106 = vpack.c.bf16 %v1044, %v1042
        %v1107 = vpack.c.bf16 %v1047, %v1045
        %v1108 = vpack.c.bf16 %v1048, %v1046
        %v1109 = vpack.c.bf16 %v1051, %v1049
        %v1110 = vpack.c.bf16 %v1052, %v1050
        %v1111 = vpack.c.bf16 %v1055, %v1053
        %v1112 = vpack.c.bf16 %v1056, %v1054
        %v1113 = vpack.c.bf16 %v1059, %v1057
        %v1114 = vpack.c.bf16 %v1060, %v1058
        %v1115 = vpack.c.bf16 %v1063, %v1061
        %v1116 = vpack.c.bf16 %v1064, %v1062
        %v1117 = vpack.c.bf16 %v1067, %v1065
        %v1118 = vpack.c.bf16 %v1068, %v1066
        %v1119 = vpack.c.bf16 %v1071, %v1069
        %v1120 = vpack.c.bf16 %v1072, %v1070
        %v1121 = vpack.c.bf16 %v1075, %v1073
        %v1122 = vpack.c.bf16 %v1076, %v1074
        %v1123 = vpack.c.bf16 %v1079, %v1077
        %v1124 = vpack.c.bf16 %v1080, %v1078
        %v1125 = vpack.c.bf16 %v1083, %v1081
        %v1126 = vpack.c.bf16 %v1084, %v1082
        %v1127 = vpack.c.bf16 %v1087, %v1085
        %v1128 = vpack.c.bf16 %v1088, %v1086
        %v1129 = vpack.c.bf16 %v1091, %v1089
        %v1130 = vpack.c.bf16 %v1092, %v1090
        %v1131 = vpack.c.bf16 %v1095, %v1093
        %v1132 = vpack.c.bf16 %v1096, %v1094
        %v1133 = vpack.c.bf16 %v1099, %v1097
        %v1134 = vpack.c.bf16 %v1100, %v1098
        %v1135 = vpack.c.bf16 %v1103, %v1101
        %v1136 = vpack.c.bf16 %v1104, %v1102
        %v1137 = vld [vmem:[#allocation8] sm:$0xf]
        %v1138 = vld [vmem:[#allocation8 + $0x4] sm:$0xf]
        %v1139 = vld [vmem:[#allocation8 + $0x8] sm:$0xf]
        %v1140 = vld [vmem:[#allocation8 + $0xc] sm:$0xf]
        %v1141 = vld [vmem:[#allocation8 + $0x10] sm:$0xf]
        %v1142 = vld [vmem:[#allocation8 + $0x14] sm:$0xf]
        %v1143 = vld [vmem:[#allocation8 + $0x18] sm:$0xf]
        %v1144 = vld [vmem:[#allocation8 + $0x1c] sm:$0xf]
        %v1145 = vld [vmem:[#allocation8 + $0x20] sm:$0xf]
        %v1146 = vld [vmem:[#allocation8 + $0x24] sm:$0xf]
        %v1147 = vld [vmem:[#allocation8 + $0x28] sm:$0xf]
        %v1148 = vld [vmem:[#allocation8 + $0x2c] sm:$0xf]
        %v1149 = vld [vmem:[#allocation8 + $0x30] sm:$0xf]
        %v1150 = vld [vmem:[#allocation8 + $0x34] sm:$0xf]
        %v1151 = vld [vmem:[#allocation8 + $0x38] sm:$0xf]
        %v1152 = vld [vmem:[#allocation8 + $0x3c] sm:$0xf]
        %v1153 = vld [vmem:[#allocation8 + $0x40] sm:$0xf]
        %v1154 = vld [vmem:[#allocation8 + $0x44] sm:$0xf]
        %v1155 = vld [vmem:[#allocation8 + $0x48] sm:$0xf]
        %v1156 = vld [vmem:[#allocation8 + $0x4c] sm:$0xf]
        %v1157 = vld [vmem:[#allocation8 + $0x50] sm:$0xf]
        %v1158 = vld [vmem:[#allocation8 + $0x54] sm:$0xf]
        %v1159 = vld [vmem:[#allocation8 + $0x58] sm:$0xf]
        %v1160 = vld [vmem:[#allocation8 + $0x5c] sm:$0xf]
        %v1161 = vld [vmem:[#allocation8 + $0x60] sm:$0xf]
        %v1162 = vld [vmem:[#allocation8 + $0x64] sm:$0xf]
        %v1163 = vld [vmem:[#allocation8 + $0x68] sm:$0xf]
        %v1164 = vld [vmem:[#allocation8 + $0x6c] sm:$0xf]
        %v1165 = vld [vmem:[#allocation8 + $0x70] sm:$0xf]
        %v1166 = vld [vmem:[#allocation8 + $0x74] sm:$0xf]
        %v1167 = vld [vmem:[#allocation8 + $0x78] sm:$0xf]
        %v1168 = vld [vmem:[#allocation8 + $0x7c] sm:$0xf]
        %v1169 = vld [vmem:[%s6] sm:$0x1]
        %v1171 = vlaneseq
        %v1172 = vshrl.u32 %v1171, 7
        %v1173 = vsub.s32 0, %v1172
        %v1174 = vrot.slane %v1169, %v1173
        %v1208 = vunpack.c.l.b16 %v1137
        %v1209 = vunpack.c.l.b16 %v1138
        %v1210 = vunpack.c.l.b16 %v1139
        %v1211 = vunpack.c.l.b16 %v1140
        %v1212 = vunpack.c.l.b16 %v1141
        %v1213 = vunpack.c.l.b16 %v1142
        %v1214 = vunpack.c.l.b16 %v1143
        %v1215 = vunpack.c.l.b16 %v1144
        %v1216 = vunpack.c.l.b16 %v1145
        %v1217 = vunpack.c.l.b16 %v1146
        %v1218 = vunpack.c.l.b16 %v1147
        %v1219 = vunpack.c.l.b16 %v1148
        %v1220 = vunpack.c.l.b16 %v1149
        %v1221 = vunpack.c.l.b16 %v1150
        %v1222 = vunpack.c.l.b16 %v1151
        %v1223 = vunpack.c.l.b16 %v1152
        %v1224 = vunpack.c.l.b16 %v1153
        %v1225 = vunpack.c.l.b16 %v1154
        %v1226 = vunpack.c.l.b16 %v1155
        %v1227 = vunpack.c.l.b16 %v1156
        %v1228 = vunpack.c.l.b16 %v1157
        %v1229 = vunpack.c.l.b16 %v1158
        %v1230 = vunpack.c.l.b16 %v1159
        %v1231 = vunpack.c.l.b16 %v1160
        %v1232 = vunpack.c.l.b16 %v1161
        %v1233 = vunpack.c.l.b16 %v1162
        %v1234 = vunpack.c.l.b16 %v1163
        %v1235 = vunpack.c.l.b16 %v1164
        %v1236 = vunpack.c.l.b16 %v1165
        %v1237 = vunpack.c.l.b16 %v1166
        %v1238 = vunpack.c.l.b16 %v1167
        %v1239 = vunpack.c.l.b16 %v1168
        %v1240 = vpack.c.b16 %v1209, %v1208
        %v1241 = vpack.c.b16 %v1211, %v1210
        %v1242 = vpack.c.b16 %v1213, %v1212
        %v1243 = vpack.c.b16 %v1215, %v1214
        %v1244 = vpack.c.b16 %v1217, %v1216
        %v1245 = vpack.c.b16 %v1219, %v1218
        %v1246 = vpack.c.b16 %v1221, %v1220
        %v1247 = vpack.c.b16 %v1223, %v1222
        %v1248 = vpack.c.b16 %v1225, %v1224
        %v1249 = vpack.c.b16 %v1227, %v1226
        %v1250 = vpack.c.b16 %v1229, %v1228
        %v1251 = vpack.c.b16 %v1231, %v1230
        %v1252 = vpack.c.b16 %v1233, %v1232
        %v1253 = vpack.c.b16 %v1235, %v1234
        %v1254 = vpack.c.b16 %v1237, %v1236
        %v1255 = vpack.c.b16 %v1239, %v1238
        %1272 = vmatprep.subr.bf16.mxu0 0
        %1273 = vmatpush1.bf16.msra.mxu0 %v1240
        %1274 = vmatprep.subr.bf16.mxu0 0
        %1275 = vmatpush1.bf16.msra.mxu0 %v1241
        %1276 = vmatprep.subr.bf16.mxu0 0
        %1277 = vmatpush1.bf16.msra.mxu0 %v1242
        %1278 = vmatprep.subr.bf16.mxu0 0
        %1279 = vmatpush1.bf16.msra.mxu0 %v1243
        %1280 = vmatprep.subr.bf16.mxu0 0
        %1281 = vmatpush1.bf16.msra.mxu0 %v1244
        %1282 = vmatprep.subr.bf16.mxu0 0
        %1283 = vmatpush1.bf16.msra.mxu0 %v1245
        %1284 = vmatprep.subr.bf16.mxu0 0
        %1285 = vmatpush1.bf16.msra.mxu0 %v1246
        %1286 = vmatprep.subr.bf16.mxu0 0
        %1287 = vmatpush1.bf16.msra.mxu0 %v1247
        %1288 = vmatprep.subr.bf16.mxu0 0
        %1289 = vmatpush1.bf16.msra.mxu0 %v1248
        %1290 = vmatprep.subr.bf16.mxu0 0
        %1291 = vmatpush1.bf16.msra.mxu0 %v1249
        %1292 = vmatprep.subr.bf16.mxu0 0
        %1293 = vmatpush1.bf16.msra.mxu0 %v1250
        %1294 = vmatprep.subr.bf16.mxu0 0
        %1295 = vmatpush1.bf16.msra.mxu0 %v1251
        %1296 = vmatprep.subr.bf16.mxu0 0
        %1297 = vmatpush1.bf16.msra.mxu0 %v1252
        %1298 = vmatprep.subr.bf16.mxu0 0
        %1299 = vmatpush1.bf16.msra.mxu0 %v1253
        %1300 = vmatprep.subr.bf16.mxu0 0
        %1301 = vmatpush1.bf16.msra.mxu0 %v1254
        %1302 = vmatprep.subr.bf16.mxu0 0
        %1303 = vmatpush1.bf16.msra.mxu0 %v1255
        %1304 = vmatprep.mubr.bf16.mxu0 %v1106
        %1305 = vmatmul.mubr.bf16.gmra.mrb[0].mxu0 %v1105
        %v1306 = vpop.f32.mrb[0].mxu0
        %v1307 = vadd.f32 %v1174, %v1306
        %v1308 = vpop.f32.mrb[0].mxu0
        %v1309 = vpop.f32.mrb[0].mxu0
        %v1310 = vadd.f32 %v1174, %v1309
        %v1311 = vpop.f32.mrb[0].mxu0
        %1312 = vmatprep.mubr.bf16.mxu0 %v1108
        %1313 = vmatmul.mubr.bf16.gmra.mrb[0].mxu0 %v1107
        %v1314 = vpop.f32.mrb[0].mxu0
        %v1315 = vadd.f32 %v1174, %v1314
        %v1316 = vpop.f32.mrb[0].mxu0
        %v1317 = vpop.f32.mrb[0].mxu0
        %v1318 = vadd.f32 %v1174, %v1317
        %v1319 = vpop.f32.mrb[0].mxu0
        %1320 = vmatprep.mubr.bf16.mxu0 %v1110
        %1321 = vmatmul.mubr.bf16.gmra.mrb[0].mxu0 %v1109
        %v1322 = vpop.f32.mrb[0].mxu0
        %v1323 = vadd.f32 %v1174, %v1322
        %v1324 = vpop.f32.mrb[0].mxu0
        %v1325 = vpop.f32.mrb[0].mxu0
        %v1326 = vadd.f32 %v1174, %v1325
        %v1327 = vpop.f32.mrb[0].mxu0
        %1328 = vmatprep.mubr.bf16.mxu0 %v1112
        %1329 = vmatmul.mubr.bf16.gmra.mrb[0].mxu0 %v1111
        %v1330 = vpop.f32.mrb[0].mxu0
        %v1331 = vadd.f32 %v1174, %v1330
        %v1332 = vpop.f32.mrb[0].mxu0
        %v1333 = vpop.f32.mrb[0].mxu0
        %v1334 = vadd.f32 %v1174, %v1333
        %v1335 = vpop.f32.mrb[0].mxu0
        %1336 = vmatprep.mubr.bf16.mxu0 %v1114
        %1337 = vmatmul.mubr.bf16.gmra.mrb[0].mxu0 %v1113
        %v1338 = vpop.f32.mrb[0].mxu0
        %v1339 = vadd.f32 %v1174, %v1338
        %v1340 = vpop.f32.mrb[0].mxu0
        %v1341 = vpop.f32.mrb[0].mxu0
        %v1342 = vadd.f32 %v1174, %v1341
        %v1343 = vpop.f32.mrb[0].mxu0
        %1344 = vmatprep.mubr.bf16.mxu0 %v1116
        %1345 = vmatmul.mubr.bf16.gmra.mrb[0].mxu0 %v1115
        %v1346 = vpop.f32.mrb[0].mxu0
        %v1347 = vadd.f32 %v1174, %v1346
        %v1348 = vpop.f32.mrb[0].mxu0
        %v1349 = vpop.f32.mrb[0].mxu0
        %v1350 = vadd.f32 %v1174, %v1349
        %v1351 = vpop.f32.mrb[0].mxu0
        %1352 = vmatprep.mubr.bf16.mxu0 %v1118
        %1353 = vmatmul.mubr.bf16.gmra.mrb[0].mxu0 %v1117
        %v1354 = vpop.f32.mrb[0].mxu0
        %v1355 = vadd.f32 %v1174, %v1354
        %v1356 = vpop.f32.mrb[0].mxu0
        %v1357 = vpop.f32.mrb[0].mxu0
        %v1358 = vadd.f32 %v1174, %v1357
        %v1359 = vpop.f32.mrb[0].mxu0
        %1360 = vmatprep.mubr.bf16.mxu0 %v1120
        %1361 = vmatmul.mubr.bf16.gmra.mrb[0].mxu0 %v1119
        %v1362 = vpop.f32.mrb[0].mxu0
        %v1363 = vadd.f32 %v1174, %v1362
        %v1364 = vpop.f32.mrb[0].mxu0
        %v1365 = vpop.f32.mrb[0].mxu0
        %v1366 = vadd.f32 %v1174, %v1365
        %v1367 = vpop.f32.mrb[0].mxu0
        %1368 = vmatprep.mubr.bf16.mxu0 %v1122
        %1369 = vmatmul.mubr.bf16.gmra.mrb[0].mxu0 %v1121
        %v1370 = vpop.f32.mrb[0].mxu0
        %v1371 = vadd.f32 %v1174, %v1370
        %v1372 = vpop.f32.mrb[0].mxu0
        %v1373 = vpop.f32.mrb[0].mxu0
        %v1374 = vadd.f32 %v1174, %v1373
        %v1375 = vpop.f32.mrb[0].mxu0
        %1376 = vmatprep.mubr.bf16.mxu0 %v1124
        %1377 = vmatmul.mubr.bf16.gmra.mrb[0].mxu0 %v1123
        %v1378 = vpop.f32.mrb[0].mxu0
        %v1379 = vadd.f32 %v1174, %v1378
        %v1380 = vpop.f32.mrb[0].mxu0
        %v1381 = vpop.f32.mrb[0].mxu0
        %v1382 = vadd.f32 %v1174, %v1381
        %v1383 = vpop.f32.mrb[0].mxu0
        %1384 = vmatprep.mubr.bf16.mxu0 %v1126
        %1385 = vmatmul.mubr.bf16.gmra.mrb[0].mxu0 %v1125
        %v1386 = vpop.f32.mrb[0].mxu0
        %v1387 = vadd.f32 %v1174, %v1386
        %v1388 = vpop.f32.mrb[0].mxu0
        %v1389 = vpop.f32.mrb[0].mxu0
        %v1390 = vadd.f32 %v1174, %v1389
        %v1391 = vpop.f32.mrb[0].mxu0
        %1392 = vmatprep.mubr.bf16.mxu0 %v1128
        %1393 = vmatmul.mubr.bf16.gmra.mrb[0].mxu0 %v1127
        %v1394 = vpop.f32.mrb[0].mxu0
        %v1395 = vadd.f32 %v1174, %v1394
        %v1396 = vpop.f32.mrb[0].mxu0
        %v1397 = vpop.f32.mrb[0].mxu0
        %v1398 = vadd.f32 %v1174, %v1397
        %v1399 = vpop.f32.mrb[0].mxu0
        %1400 = vmatprep.mubr.bf16.mxu0 %v1130
        %1401 = vmatmul.mubr.bf16.gmra.mrb[0].mxu0 %v1129
        %v1402 = vpop.f32.mrb[0].mxu0
        %v1403 = vadd.f32 %v1174, %v1402
        %v1404 = vpop.f32.mrb[0].mxu0
        %v1405 = vpop.f32.mrb[0].mxu0
        %v1406 = vadd.f32 %v1174, %v1405
        %v1407 = vpop.f32.mrb[0].mxu0
        %1408 = vmatprep.mubr.bf16.mxu0 %v1132
        %1409 = vmatmul.mubr.bf16.gmra.mrb[0].mxu0 %v1131
        %v1410 = vpop.f32.mrb[0].mxu0
        %v1411 = vadd.f32 %v1174, %v1410
        %v1412 = vpop.f32.mrb[0].mxu0
        %v1413 = vpop.f32.mrb[0].mxu0
        %v1414 = vadd.f32 %v1174, %v1413
        %v1415 = vpop.f32.mrb[0].mxu0
        %1416 = vmatprep.mubr.bf16.mxu0 %v1134
        %1417 = vmatmul.mubr.bf16.gmra.mrb[0].mxu0 %v1133
        %v1418 = vpop.f32.mrb[0].mxu0
        %v1419 = vadd.f32 %v1174, %v1418
        %v1420 = vpop.f32.mrb[0].mxu0
        %v1421 = vpop.f32.mrb[0].mxu0
        %v1422 = vadd.f32 %v1174, %v1421
        %v1423 = vpop.f32.mrb[0].mxu0
        %1424 = vmatprep.mubr.bf16.mxu0 %v1136
        %1425 = vmatmul.mubr.bf16.gmra.mrb[0].mxu0 %v1135
        %v1426 = vpop.f32.mrb[0].mxu0
        %v1427 = vadd.f32 %v1174, %v1426
        %v1428 = vpop.f32.mrb[0].mxu0
        %v1429 = vpop.f32.mrb[0].mxu0
        %v1430 = vadd.f32 %v1174, %v1429
        %v1431 = vpop.f32.mrb[0].mxu0
        %1432 = vdwg.mxu0
        %v1433 = vmax.f32 %v1307, 0.0
        %v1434 = vmax.f32 %v1310, 0.0
        %v1435 = vmax.f32 %v1315, 0.0
        %v1436 = vmax.f32 %v1318, 0.0
        %v1437 = vmax.f32 %v1323, 0.0
        %v1438 = vmax.f32 %v1326, 0.0
        %v1439 = vmax.f32 %v1331, 0.0
        %v1440 = vmax.f32 %v1334, 0.0
        %v1441 = vmax.f32 %v1339, 0.0
        %v1442 = vmax.f32 %v1342, 0.0
        %v1443 = vmax.f32 %v1347, 0.0
        %v1444 = vmax.f32 %v1350, 0.0
        %v1445 = vmax.f32 %v1355, 0.0
        %v1446 = vmax.f32 %v1358, 0.0
        %v1447 = vmax.f32 %v1363, 0.0
        %v1448 = vmax.f32 %v1366, 0.0
        %v1449 = vmax.f32 %v1371, 0.0
        %v1450 = vmax.f32 %v1374, 0.0
        %v1451 = vmax.f32 %v1379, 0.0
        %v1452 = vmax.f32 %v1382, 0.0
        %v1453 = vmax.f32 %v1387, 0.0
        %v1454 = vmax.f32 %v1390, 0.0
        %v1455 = vmax.f32 %v1395, 0.0
        %v1456 = vmax.f32 %v1398, 0.0
        %v1457 = vmax.f32 %v1403, 0.0
        %v1458 = vmax.f32 %v1406, 0.0
        %v1459 = vmax.f32 %v1411, 0.0
        %v1460 = vmax.f32 %v1414, 0.0
        %v1461 = vmax.f32 %v1419, 0.0
        %v1462 = vmax.f32 %v1422, 0.0
        %v1463 = vmax.f32 %v1427, 0.0
        %v1464 = vmax.f32 %v1430, 0.0
        %v1465 = vpack.c.bf16 %v1434, %v1433
        %v1466 = vpack.c.bf16 %v1436, %v1435
        %v1467 = vpack.c.bf16 %v1438, %v1437
        %v1468 = vpack.c.bf16 %v1440, %v1439
        %v1469 = vpack.c.bf16 %v1442, %v1441
        %v1470 = vpack.c.bf16 %v1444, %v1443
        %v1471 = vpack.c.bf16 %v1446, %v1445
        %v1472 = vpack.c.bf16 %v1448, %v1447
        %v1473 = vpack.c.bf16 %v1450, %v1449
        %v1474 = vpack.c.bf16 %v1452, %v1451
        %v1475 = vpack.c.bf16 %v1454, %v1453
        %v1476 = vpack.c.bf16 %v1456, %v1455
        %v1477 = vpack.c.bf16 %v1458, %v1457
        %v1478 = vpack.c.bf16 %v1460, %v1459
        %v1479 = vpack.c.bf16 %v1462, %v1461
        %v1480 = vpack.c.bf16 %v1464, %v1463
        %v1481 = vld [vmem:[#allocation10] sm:$0xf]
        %v1482 = vld [vmem:[#allocation10 + $0x4] sm:$0xf]
        %v1483 = vld [vmem:[#allocation10 + $0x8] sm:$0xf]
        %v1484 = vld [vmem:[#allocation10 + $0xc] sm:$0xf]
        %v1485 = vld [vmem:[#allocation10 + $0x10] sm:$0xf]
        %v1486 = vld [vmem:[#allocation10 + $0x14] sm:$0xf]
        %v1487 = vld [vmem:[#allocation10 + $0x18] sm:$0xf]
        %v1488 = vld [vmem:[#allocation10 + $0x1c] sm:$0xf]
        %v1489 = vld [vmem:[#allocation10 + $0x20] sm:$0xf]
        %v1490 = vld [vmem:[#allocation10 + $0x24] sm:$0xf]
        %v1491 = vld [vmem:[#allocation10 + $0x28] sm:$0xf]
        %v1492 = vld [vmem:[#allocation10 + $0x2c] sm:$0xf]
        %v1493 = vld [vmem:[#allocation10 + $0x30] sm:$0xf]
        %v1494 = vld [vmem:[#allocation10 + $0x34] sm:$0xf]
        %v1495 = vld [vmem:[#allocation10 + $0x38] sm:$0xf]
        %v1496 = vld [vmem:[#allocation10 + $0x3c] sm:$0xf]
        %v1497 = vld [vmem:[%s8] sm:$0x1]
        %v1499 = vlaneseq
        %v1500 = vshrl.u32 %v1499, 7
        %v1501 = vsub.s32 0, %v1500
        %v1502 = vrot.slane %v1497, %v1501
        %v1520 = vunpack.c.l.b16 %v1481
        %v1521 = vunpack.c.l.b16 %v1482
        %v1522 = vunpack.c.l.b16 %v1483
        %v1523 = vunpack.c.l.b16 %v1484
        %v1524 = vunpack.c.l.b16 %v1485
        %v1525 = vunpack.c.l.b16 %v1486
        %v1526 = vunpack.c.l.b16 %v1487
        %v1527 = vunpack.c.l.b16 %v1488
        %v1528 = vunpack.c.l.b16 %v1489
        %v1529 = vunpack.c.l.b16 %v1490
        %v1530 = vunpack.c.l.b16 %v1491
        %v1531 = vunpack.c.l.b16 %v1492
        %v1532 = vunpack.c.l.b16 %v1493
        %v1533 = vunpack.c.l.b16 %v1494
        %v1534 = vunpack.c.l.b16 %v1495
        %v1535 = vunpack.c.l.b16 %v1496
        %v1536 = vpack.c.b16 %v1521, %v1520
        %v1537 = vpack.c.b16 %v1523, %v1522
        %v1538 = vpack.c.b16 %v1525, %v1524
        %v1539 = vpack.c.b16 %v1527, %v1526
        %v1540 = vpack.c.b16 %v1529, %v1528
        %v1541 = vpack.c.b16 %v1531, %v1530
        %v1542 = vpack.c.b16 %v1533, %v1532
        %v1543 = vpack.c.b16 %v1535, %v1534
        %1552 = vmatprep.subr.bf16.mxu0 0
        %1553 = vmatpush1.bf16.msra.mxu0 %v1536
        %1554 = vmatprep.subr.bf16.mxu0 0
        %1555 = vmatpush1.bf16.msra.mxu0 %v1537
        %1556 = vmatprep.subr.bf16.mxu0 0
        %1557 = vmatpush1.bf16.msra.mxu0 %v1538
        %1558 = vmatprep.subr.bf16.mxu0 0
        %1559 = vmatpush1.bf16.msra.mxu0 %v1539
        %1560 = vmatprep.subr.bf16.mxu0 0
        %1561 = vmatpush1.bf16.msra.mxu0 %v1540
        %1562 = vmatprep.subr.bf16.mxu0 0
        %1563 = vmatpush1.bf16.msra.mxu0 %v1541
        %1564 = vmatprep.subr.bf16.mxu0 0
        %1565 = vmatpush1.bf16.msra.mxu0 %v1542
        %1566 = vmatprep.subr.bf16.mxu0 0
        %1567 = vmatpush1.bf16.msra.mxu0 %v1543
        %1568 = vmatprep.subr.bf16.mxu0 0
        %1569 = vmatpush1.bf16.msra.mxu0 0
        %1570 = vmatprep.subr.bf16.mxu0 0
        %1571 = vmatpush1.bf16.msra.mxu0 0
        %1572 = vmatprep.subr.bf16.mxu0 0
        %1573 = vmatpush1.bf16.msra.mxu0 0
        %1574 = vmatprep.subr.bf16.mxu0 0
        %1575 = vmatpush1.bf16.msra.mxu0 0
        %1576 = vmatprep.subr.bf16.mxu0 0
        %1577 = vmatpush1.bf16.msra.mxu0 0
        %1578 = vmatprep.subr.bf16.mxu0 0
        %1579 = vmatpush1.bf16.msra.mxu0 0
        %1580 = vmatprep.subr.bf16.mxu0 0
        %1581 = vmatpush1.bf16.msra.mxu0 0
        %1582 = vmatprep.subr.bf16.mxu0 0
        %1583 = vmatpush1.bf16.msra.mxu0 0
        %1584 = vmatprep.mubr.bf16.mxu0 0
        %1585 = vmatmul.mubr.bf16.gmra.mrb[0].mxu0 %v1465
        %v1586 = vpop.f32.mrb[0].mxu0
        %v1587 = vadd.f32 %v1502, %v1586
        %v1588 = vpop.f32.mrb[0].mxu0
        %v1589 = vpop.f32.mrb[0].mxu0
        %v1590 = vadd.f32 %v1502, %v1589
        %v1591 = vpop.f32.mrb[0].mxu0
        %1592 = vmatprep.mubr.bf16.mxu0 0
        %1593 = vmatmul.mubr.bf16.gmra.mrb[0].mxu0 %v1466
        %v1594 = vpop.f32.mrb[0].mxu0
        %v1595 = vadd.f32 %v1502, %v1594
        %v1596 = vpop.f32.mrb[0].mxu0
        %v1597 = vpop.f32.mrb[0].mxu0
        %v1598 = vadd.f32 %v1502, %v1597
        %v1599 = vpop.f32.mrb[0].mxu0
        %1600 = vmatprep.mubr.bf16.mxu0 0
        %1601 = vmatmul.mubr.bf16.gmra.mrb[0].mxu0 %v1467
        %v1602 = vpop.f32.mrb[0].mxu0
        %v1603 = vadd.f32 %v1502, %v1602
        %v1604 = vpop.f32.mrb[0].mxu0
        %v1605 = vpop.f32.mrb[0].mxu0
        %v1606 = vadd.f32 %v1502, %v1605
        %v1607 = vpop.f32.mrb[0].mxu0
        %1608 = vmatprep.mubr.bf16.mxu0 0
        %1609 = vmatmul.mubr.bf16.gmra.mrb[0].mxu0 %v1468
        %v1610 = vpop.f32.mrb[0].mxu0
        %v1611 = vadd.f32 %v1502, %v1610
        %v1612 = vpop.f32.mrb[0].mxu0
        %v1613 = vpop.f32.mrb[0].mxu0
        %v1614 = vadd.f32 %v1502, %v1613
        %v1615 = vpop.f32.mrb[0].mxu0
        %1616 = vmatprep.mubr.bf16.mxu0 0
        %1617 = vmatmul.mubr.bf16.gmra.mrb[0].mxu0 %v1469
        %v1618 = vpop.f32.mrb[0].mxu0
        %v1619 = vadd.f32 %v1502, %v1618
        %v1620 = vpop.f32.mrb[0].mxu0
        %v1621 = vpop.f32.mrb[0].mxu0
        %v1622 = vadd.f32 %v1502, %v1621
        %v1623 = vpop.f32.mrb[0].mxu0
        %1624 = vmatprep.mubr.bf16.mxu0 0
        %1625 = vmatmul.mubr.bf16.gmra.mrb[0].mxu0 %v1470
        %v1626 = vpop.f32.mrb[0].mxu0
        %v1627 = vadd.f32 %v1502, %v1626
        %v1628 = vpop.f32.mrb[0].mxu0
        %v1629 = vpop.f32.mrb[0].mxu0
        %v1630 = vadd.f32 %v1502, %v1629
        %v1631 = vpop.f32.mrb[0].mxu0
        %1632 = vmatprep.mubr.bf16.mxu0 0
        %1633 = vmatmul.mubr.bf16.gmra.mrb[0].mxu0 %v1471
        %v1634 = vpop.f32.mrb[0].mxu0
        %v1635 = vadd.f32 %v1502, %v1634
        %v1636 = vpop.f32.mrb[0].mxu0
        %v1637 = vpop.f32.mrb[0].mxu0
        %v1638 = vadd.f32 %v1502, %v1637
        %v1639 = vpop.f32.mrb[0].mxu0
        %1640 = vmatprep.mubr.bf16.mxu0 0
        %1641 = vmatmul.mubr.bf16.gmra.mrb[0].mxu0 %v1472
        %v1642 = vpop.f32.mrb[0].mxu0
        %v1643 = vadd.f32 %v1502, %v1642
        %v1644 = vpop.f32.mrb[0].mxu0
        %v1645 = vpop.f32.mrb[0].mxu0
        %v1646 = vadd.f32 %v1502, %v1645
        %v1647 = vpop.f32.mrb[0].mxu0
        %1648 = vmatprep.mubr.bf16.mxu0 0
        %1649 = vmatmul.mubr.bf16.gmra.mrb[0].mxu0 %v1473
        %v1650 = vpop.f32.mrb[0].mxu0
        %v1651 = vadd.f32 %v1502, %v1650
        %v1652 = vpop.f32.mrb[0].mxu0
        %v1653 = vpop.f32.mrb[0].mxu0
        %v1654 = vadd.f32 %v1502, %v1653
        %v1655 = vpop.f32.mrb[0].mxu0
        %1656 = vmatprep.mubr.bf16.mxu0 0
        %1657 = vmatmul.mubr.bf16.gmra.mrb[0].mxu0 %v1474
        %v1658 = vpop.f32.mrb[0].mxu0
        %v1659 = vadd.f32 %v1502, %v1658
        %v1660 = vpop.f32.mrb[0].mxu0
        %v1661 = vpop.f32.mrb[0].mxu0
        %v1662 = vadd.f32 %v1502, %v1661
        %v1663 = vpop.f32.mrb[0].mxu0
        %1664 = vmatprep.mubr.bf16.mxu0 0
        %1665 = vmatmul.mubr.bf16.gmra.mrb[0].mxu0 %v1475
        %v1666 = vpop.f32.mrb[0].mxu0
        %v1667 = vadd.f32 %v1502, %v1666
        %v1668 = vpop.f32.mrb[0].mxu0
        %v1669 = vpop.f32.mrb[0].mxu0
        %v1670 = vadd.f32 %v1502, %v1669
        %v1671 = vpop.f32.mrb[0].mxu0
        %1672 = vmatprep.mubr.bf16.mxu0 0
        %1673 = vmatmul.mubr.bf16.gmra.mrb[0].mxu0 %v1476
        %v1674 = vpop.f32.mrb[0].mxu0
        %v1675 = vadd.f32 %v1502, %v1674
        %v1676 = vpop.f32.mrb[0].mxu0
        %v1677 = vpop.f32.mrb[0].mxu0
        %v1678 = vadd.f32 %v1502, %v1677
        %v1679 = vpop.f32.mrb[0].mxu0
        %1680 = vmatprep.mubr.bf16.mxu0 0
        %1681 = vmatmul.mubr.bf16.gmra.mrb[0].mxu0 %v1477
        %v1682 = vpop.f32.mrb[0].mxu0
        %v1683 = vadd.f32 %v1502, %v1682
        %v1684 = vpop.f32.mrb[0].mxu0
        %v1685 = vpop.f32.mrb[0].mxu0
        %v1686 = vadd.f32 %v1502, %v1685
        %v1687 = vpop.f32.mrb[0].mxu0
        %1688 = vmatprep.mubr.bf16.mxu0 0
        %1689 = vmatmul.mubr.bf16.gmra.mrb[0].mxu0 %v1478
        %v1690 = vpop.f32.mrb[0].mxu0
        %v1691 = vadd.f32 %v1502, %v1690
        %v1692 = vpop.f32.mrb[0].mxu0
        %v1693 = vpop.f32.mrb[0].mxu0
        %v1694 = vadd.f32 %v1502, %v1693
        %v1695 = vpop.f32.mrb[0].mxu0
        %1696 = vmatprep.mubr.bf16.mxu0 0
        %1697 = vmatmul.mubr.bf16.gmra.mrb[0].mxu0 %v1479
        %v1698 = vpop.f32.mrb[0].mxu0
        %v1699 = vadd.f32 %v1502, %v1698
        %v1700 = vpop.f32.mrb[0].mxu0
        %v1701 = vpop.f32.mrb[0].mxu0
        %v1702 = vadd.f32 %v1502, %v1701
        %v1703 = vpop.f32.mrb[0].mxu0
        %1704 = vmatprep.mubr.bf16.mxu0 0
        %1705 = vmatmul.mubr.bf16.gmra.mrb[0].mxu0 %v1480
        %v1706 = vpop.f32.mrb[0].mxu0
        %v1707 = vadd.f32 %v1502, %v1706
        %v1708 = vpop.f32.mrb[0].mxu0
        %v1709 = vpop.f32.mrb[0].mxu0
        %v1710 = vadd.f32 %v1502, %v1709
        %v1711 = vpop.f32.mrb[0].mxu0
        %1712 = vdwg.mxu0
        %1713 = vst [vmem:[%s408] sm:$0xff] %v1587
        %1714 = vst [vmem:[%s408 + $0x8] sm:$0xff] %v1590
        %1715 = vst [vmem:[%s408 + $0x10] sm:$0xff] %v1595
        %1716 = vst [vmem:[%s408 + $0x18] sm:$0xff] %v1598
        %1717 = vst [vmem:[%s408 + $0x20] sm:$0xff] %v1603
        %1718 = vst [vmem:[%s408 + $0x28] sm:$0xff] %v1606
        %1719 = vst [vmem:[%s408 + $0x30] sm:$0xff] %v1611
        %1720 = vst [vmem:[%s408 + $0x38] sm:$0xff] %v1614
        %1721 = vst [vmem:[%s408 + $0x40] sm:$0xff] %v1619
        %1722 = vst [vmem:[%s408 + $0x48] sm:$0xff] %v1622
        %1723 = vst [vmem:[%s408 + $0x50] sm:$0xff] %v1627
        %1724 = vst [vmem:[%s408 + $0x58] sm:$0xff] %v1630
        %1725 = vst [vmem:[%s408 + $0x60] sm:$0xff] %v1635
        %1726 = vst [vmem:[%s408 + $0x68] sm:$0xff] %v1638
        %1727 = vst [vmem:[%s408 + $0x70] sm:$0xff] %v1643
        %1728 = vst [vmem:[%s408 + $0x78] sm:$0xff] %v1646
        %1729 = vst [vmem:[%s408 + $0x80] sm:$0xff] %v1651
        %1730 = vst [vmem:[%s408 + $0x88] sm:$0xff] %v1654
        %1731 = vst [vmem:[%s408 + $0x90] sm:$0xff] %v1659
        %1732 = vst [vmem:[%s408 + $0x98] sm:$0xff] %v1662
        %1733 = vst [vmem:[%s408 + $0xa0] sm:$0xff] %v1667
        %1734 = vst [vmem:[%s408 + $0xa8] sm:$0xff] %v1670
        %1735 = vst [vmem:[%s408 + $0xb0] sm:$0xff] %v1675
        %1736 = vst [vmem:[%s408 + $0xb8] sm:$0xff] %v1678
        %1737 = vst [vmem:[%s408 + $0xc0] sm:$0xff] %v1683
        %1738 = vst [vmem:[%s408 + $0xc8] sm:$0xff] %v1686
        %1739 = vst [vmem:[%s408 + $0xd0] sm:$0xff] %v1691
        %1740 = vst [vmem:[%s408 + $0xd8] sm:$0xff] %v1694
        %1741 = vst [vmem:[%s408 + $0xe0] sm:$0xff] %v1699
        %1742 = vst [vmem:[%s408 + $0xe8] sm:$0xff] %v1702
        %1743 = vst [vmem:[%s408 + $0xf0] sm:$0xff] %v1707
        %1744 = vst [vmem:[%s408 + $0xf8] sm:$0xff] %v1710
        %s1745 = sand.u32 %s230, 1
        %s1746 = scalar_lea.sflag [#allocation4], %s1745
        %s1747 = sand.u32 %s230, 1
        %s1748 = smul.addr %s1747, 256
        %s1749 = scalar_lea.vmem [#allocation11], %s1748
        // Predicated region
        $region77: #{tpu_custom_call.1} parent=55 // pred_check
          %p1750 = pneg %p240
        $region78: #{tpu_custom_call.1} parent=55 // pred_check_branch
          %1752 = sbr.rel (%p1750) target = $region80
        $region79: #{tpu_custom_call.1} parent=55 // pred_region
          %s1753 = smul.u32 32, %s28
          %s1755 = ssub.s32 4096, 4096
          %1756 = vsyncadd %s1746, %s1755
          %s1757 = smul.addr %s1753, 128
          %s1758 = scalar_lea.hbm %s9, %s1757
          %s1759 = sshll.u32 %s1749, 4
          %s1760 = int_to_ptr.vmem [resolvable:$true] %s1759
          %1765 = dma.vmem_to_hbm [thread:$0]  %s1760, 4096, %s1758, %s1746, 128, 128, 8
        $region80: #{tpu_custom_call.1} parent=55 // pred_fallthru
          _
      $region56: #{tpu_custom_call.1} parent=5 // pred_fallthru
        _
      %p1766 = scmp.le.s32.totalorder 2, %s23
      // Predicated region
      $region81: #{tpu_custom_call.1} parent=5 // pred_check
        %p1767 = pneg %p1766
      $region82: #{tpu_custom_call.1} parent=5 // pred_check_branch
        %1769 = sbr.rel (%p1767) target = $region84
      $region83: #{tpu_custom_call.1} parent=5 // pred_region
        %s1770 = ssub.s32 %s23, 2
        // Predicated region
        $region85: #{tpu_custom_call.1} parent=83 // pred_check
          %p1771 = pneg %p246
        $region86: #{tpu_custom_call.1} parent=83 // pred_check_branch
          %1773 = sbr.rel (%p1771) target = $region88
        $region87: #{tpu_custom_call.1} parent=83 // pred_region
          %s1774 = sand.u32 %s231, 1
          %s1775 = scalar_lea.sflag [#allocation4], %s1774
          %s1776 = sand.u32 %s231, 1
          %s1777 = smul.addr %s1776, 256
          %s1778 = scalar_lea.vmem [#allocation11], %s1777
          %1779 = dma.done %s1775, 4096
        $region88: #{tpu_custom_call.1} parent=83 // pred_fallthru
          _
      $region84: #{tpu_custom_call.1} parent=5 // pred_fallthru
        _
    $region6: #{tpu_custom_call.1} parent=1 // loop_footer
      %s27 = sadd.s32 1, %s23
    $region7: #{tpu_custom_call.1} parent=1 // loop_footer_branch
      %22 = sbr.rel target = $region3
    $region8: #{tpu_custom_call.1} parent=1 // loop_exit
      _
    %1780 = vsyncpa [#allocation3], 1
    %s1781 = scalar_lea.sflag [#allocation3], 1
    %1782 = vsyncpa %s1781, 1
    %1783 = vsyncpa [#allocation6], 1
    %1784 = vsyncpa [#allocation9], 1
    %1785 = vsyncpa [#allocation4], 1
    %s1786 = scalar_lea.sflag [#allocation4], 1
    %1787 = vsyncpa %s1786, 1

</llo_original>
